<compile_context>
chip_gen: v6e
topology: v6e:2x2x1
jax: 0.10.0
libtpu: 0.0.40
codegen_flags: <defaults>
</compile_context>

<pallas_src>
import math
import jax
import jax.numpy as jnp
from jax import lax
from jax.experimental import pallas as pl
from jax.experimental.pallas import tpu as pltpu  # noqa: F401  (TPU backend)

# ---- model dims (small, TPU-friendly) ----
B = 2            # batch
S = 8            # sequence length
H = 32           # hidden size
NH = 4           # heads
HD = H // NH     # head dim
V = 64           # vocab size
V_PAD = 128      # lane-dense LM-head width (multiple of 128, sliced to V)
FF = 4 * H       # MLP width (=128, lane-dense)
BS = B * S       # fused matmul M dimension

# rows of the packed (NVEC, H) f32 vector slab
NVEC = 11
LN1G, LN1B, BQ, BK, BV, BO, LN2G, LN2B, B2, LNFG, LNFB = range(NVEC)


def _gelu_tanh(x):
    c = math.sqrt(2.0 / math.pi)
    return 0.5 * x * (1.0 + jnp.tanh(c * (x + 0.044715 * x * x * x)))


def _layernorm(x, g, b, eps=1e-5):
    mean = jnp.mean(x, axis=-1, keepdims=True)
    var = jnp.mean((x - mean) ** 2, axis=-1, keepdims=True)
    return (x - mean) * lax.rsqrt(var + eps) * g + b


def decoder_kernel(
    ids_ref, mask_ref, emb_ref, vec_ref, b1_ref,
    wqkv_ref, wo_ref, w1_ref, w2_ref, wlm_ref,
    out_ref,
):
    vec = vec_ref[...]                       # (NVEC, H) f32 — packed LN/bias slab

    def vrow(i):                             # (1, H) f32 row of the slab
        return vec[i:i + 1, :]

    # ---- embedding gather as an exact one-hot matmul (one-hot is 0/1) ----
    ids = ids_ref[...]                                         # (BS, 1) int32
    vocab = lax.broadcasted_iota(jnp.int32, (BS, V), 1)
    onehot = (ids == vocab).astype(jnp.float32)                # (BS, V)
    x = jnp.dot(onehot, emb_ref[...],
                preferred_element_type=jnp.float32)            # (BS, H) f32

    # ---- additive attention bias (causal + key padding), built once ----
    row = lax.broadcasted_iota(jnp.int32, (S, S), 0)
    col = lax.broadcasted_iota(jnp.int32, (S, S), 1)
    causal = col <= row                                        # (S, S)
    key_valid = mask_ref[...] != 0                             # (B, S)
    keep = jnp.logical_and(causal[None, :, :], key_valid[:, None, :])
    bias = jnp.where(keep, 0.0, -1e9).astype(jnp.float32)      # (B, S, S)

    # ---- self-attention: single fused QKV projection ----
    h1 = _layernorm(x, vrow(LN1G), vrow(LN1B))
    qkv = jnp.dot(h1.astype(jnp.bfloat16), wqkv_ref[...],
                  preferred_element_type=jnp.float32)          # (BS, 3H), 1 MXU push
    q = qkv[:, 0 * H:1 * H] + vrow(BQ)    # 1/sqrt(HD) folded into wq/bq at prep
    k = qkv[:, 1 * H:2 * H] + vrow(BK)
    v = qkv[:, 2 * H:3 * H] + vrow(BV)

    heads = []
    for h in range(NH):                   # static unroll; batch dims would unroll
        sl = slice(h * HD, (h + 1) * HD)  # to the same MXU ops anyway
        qh = q[:, sl].reshape(B, S, HD).astype(jnp.bfloat16)
        kh = k[:, sl].reshape(B, S, HD).astype(jnp.bfloat16)
        vh = v[:, sl].reshape(B, S, HD).astype(jnp.bfloat16)
        scores = jnp.einsum('bqd,bkd->bqk', qh, kh,
                            preferred_element_type=jnp.float32) + bias
        m = jnp.max(scores, axis=-1, keepdims=True)
        p = jnp.exp(scores - m)
        p = p * pl.reciprocal(jnp.sum(p, axis=-1, keepdims=True), approx=True)
        oh = jnp.einsum('bqk,bkd->bqd', p.astype(jnp.bfloat16), vh,
                        preferred_element_type=jnp.float32)
        heads.append(oh.reshape(BS, HD))

    # single fused output projection (== concat(heads) @ Wo)
    attn_cat = jnp.concatenate(heads, axis=-1)                 # (BS, H)
    attn = jnp.dot(attn_cat.astype(jnp.bfloat16), wo_ref[...],
                   preferred_element_type=jnp.float32)         # 1 MXU push
    x = x + attn + vrow(BO)

    # ---- MLP ----
    h2 = _layernorm(x, vrow(LN2G), vrow(LN2B))
    ff = jnp.dot(h2.astype(jnp.bfloat16), w1_ref[...],
                 preferred_element_type=jnp.float32) + b1_ref[...]
    ff = _gelu_tanh(ff)
    ff = jnp.dot(ff.astype(jnp.bfloat16), w2_ref[...],
                 preferred_element_type=jnp.float32) + vrow(B2)
    x = x + ff

    # ---- final LN + LM head (lane-dense: V padded to V_PAD) ----
    hf = _layernorm(x, vrow(LNFG), vrow(LNFB))
    out_ref[...] = jnp.dot(hf.astype(jnp.bfloat16), wlm_ref[...],
                           preferred_element_type=jnp.float32)


def init_params(key):
    ks = jax.random.split(key, 8)
    s = 0.02
    return dict(
        emb=jax.random.normal(ks[0], (V, H), jnp.float32) * s,
        ln1g=jnp.ones((1, H), jnp.float32), ln1b=jnp.zeros((1, H), jnp.float32),
        wq=jax.random.normal(ks[1], (H, H), jnp.float32) * s,
        wk=jax.random.normal(ks[2], (H, H), jnp.float32) * s,
        wv=jax.random.normal(ks[3], (H, H), jnp.float32) * s,
        bq=jnp.zeros((H,), jnp.float32),
        bk=jnp.zeros((H,), jnp.float32),
        bv=jnp.zeros((H,), jnp.float32),
        wo=jax.random.normal(ks[4], (H, H), jnp.float32) * s,
        bo=jnp.zeros((1, H), jnp.float32),
        ln2g=jnp.ones((1, H), jnp.float32), ln2b=jnp.zeros((1, H), jnp.float32),
        w1=jax.random.normal(ks[5], (H, FF), jnp.float32) * s,
        b1=jnp.zeros((1, FF), jnp.float32),
        w2=jax.random.normal(ks[6], (FF, H), jnp.float32) * s,
        b2=jnp.zeros((1, H), jnp.float32),
        lnfg=jnp.ones((1, H), jnp.float32), lnfb=jnp.zeros((1, H), jnp.float32),
        wlm=jax.random.normal(ks[7], (H, V), jnp.float32) * s,
    )


def prepare_weights(params):
    """ONE-TIME preprocessing (off the per-call path): QKV fusion + scale fold,
    bf16 casts, LN/bias slab packing, lane-dense LM-head padding."""
    bf = jnp.bfloat16
    scale = 1.0 / math.sqrt(HD)
    wqkv = jnp.concatenate(
        [params["wq"] * scale, params["wk"], params["wv"]], axis=1).astype(bf)  # (H, 3H)
    vec = jnp.stack([
        params["ln1g"][0], params["ln1b"][0],
        params["bq"] * scale, params["bk"], params["bv"],
        params["bo"][0], params["ln2g"][0], params["ln2b"][0],
        params["b2"][0], params["lnfg"][0], params["lnfb"][0],
    ], axis=0).astype(jnp.float32)                                             # (NVEC, H)
    # TODO(synk): at realistic H/V the LM head must be tiled over the vocab dim
    # (tn ~512-1024 lanes) with vmem_limit_bytes set explicitly in
    # pltpu.CompilerParams so the double-buffered tiles also fit v7x's 64 MiB VMEM.
    wlm = jnp.zeros((H, V_PAD), bf).at[:, :V].set(params["wlm"].astype(bf))
    return dict(
        emb=params["emb"].astype(jnp.float32),
        vec=vec,
        b1=params["b1"].astype(jnp.float32),
        wqkv=wqkv,
        wo=params["wo"].astype(bf),
        w1=params["w1"].astype(bf),
        w2=params["w2"].astype(bf),
        wlm=wlm,
    )


@jax.jit
def text_generation_logits(input_ids, attention_mask, prepped):
    ids = input_ids.reshape(BS, 1).astype(jnp.int32)
    mask = attention_mask.astype(jnp.int32)

    # Single grid-less invocation: whole (tiny) operands live in VMEM, no
    # per-step pipeline overhead; prologue is 10 DMAs instead of 21.
    out = pl.pallas_call(
        decoder_kernel,
        out_shape=jax.ShapeDtypeStruct((BS, V_PAD), jnp.float32),
    )(ids, mask, prepped["emb"], prepped["vec"], prepped["b1"],
      prepped["wqkv"], prepped["wo"], prepped["w1"], prepped["w2"],
      prepped["wlm"])

    return out.reshape(B, S, V_PAD)[:, :, :V]


if __name__ == "__main__":
    key = jax.random.PRNGKey(0)
    pkey, ikey = jax.random.split(key)
    params = init_params(pkey)
    prepped = prepare_weights(params)        # one-time, not on the hot path

    input_ids = jax.random.randint(ikey, (B, S), 0, V, dtype=jnp.int32)
    # last two positions of batch element 1 are padding
    attention_mask = jnp.array(
        [[1, 1, 1, 1, 1, 1, 1, 1],
         [1, 1, 1, 1, 1, 1, 0, 0]], dtype=jnp.int32)

    logits = text_generation_logits(input_ids, attention_mask, prepped)
    jax.block_until_ready(logits)
    assert logits.shape == (B, S, V) and logits.dtype == jnp.float32
    print("KERNEL_OK")
</pallas_src>

<mosaic_0001>
module attributes {stable_mosaic.version = 11 : i64} {
  func.func @decoder_kernel(%arg0: memref<16x1xi32, #tpu.memory_space<vmem>>, %arg1: memref<2x8xi32, #tpu.memory_space<vmem>>, %arg2: memref<64x32xf32, #tpu.memory_space<vmem>>, %arg3: memref<11x32xf32, #tpu.memory_space<vmem>>, %arg4: memref<1x128xf32, #tpu.memory_space<vmem>>, %arg5: memref<32x96xbf16, #tpu.memory_space<vmem>>, %arg6: memref<32x32xbf16, #tpu.memory_space<vmem>>, %arg7: memref<32x128xbf16, #tpu.memory_space<vmem>>, %arg8: memref<128x32xbf16, #tpu.memory_space<vmem>>, %arg9: memref<32x128xbf16, #tpu.memory_space<vmem>>, %arg10: memref<16x128xf32, #tpu.memory_space<vmem>>) attributes {dimension_semantics = [], scalar_prefetch = 0 : i64, scratch_operands = 0 : i64, tpu.core_type = #tpu.core_type<tc>} {
    %c0 = arith.constant 0 : index
    %c0_0 = arith.constant 0 : index
    %0 = vector.load %arg3[%c0, %c0_0] : memref<11x32xf32, #tpu.memory_space<vmem>>, vector<11x32xf32>
    %c0_1 = arith.constant 0 : index
    %c0_2 = arith.constant 0 : index
    %1 = vector.load %arg0[%c0_1, %c0_2] : memref<16x1xi32, #tpu.memory_space<vmem>>, vector<16x1xi32>
    %2 = tpu.iota {dimensions = array<i32: 1>} : vector<16x64xi32>
    %3 = vector.broadcast %1 : vector<16x1xi32> to vector<16x64xi32>
    %4 = arith.cmpi eq, %3, %2 : vector<16x64xi32>
    %5 = arith.extui %4 : vector<16x64xi1> to vector<16x64xi32>
    %6 = arith.sitofp %5 : vector<16x64xi32> to vector<16x64xf32>
    %c0_3 = arith.constant 0 : index
    %c0_4 = arith.constant 0 : index
    %7 = vector.load %arg2[%c0_3, %c0_4] : memref<64x32xf32, #tpu.memory_space<vmem>>, vector<64x32xf32>
    %cst = arith.constant dense<0.000000e+00> : vector<16x32xf32>
    %8 = tpu.matmul %6, %7, %cst {dimension_numbers = #tpu.dot_dimension_numbers<[1], [0], [0], [1], [0, 0, 1, 1], [], []>} : vector<16x64xf32>, vector<64x32xf32>, vector<16x32xf32> -> vector<16x32xf32>
    %9 = tpu.iota {dimensions = array<i32: 0>} : vector<8x8xi32>
    %10 = tpu.iota {dimensions = array<i32: 1>} : vector<8x8xi32>
    %11 = arith.cmpi sle, %10, %9 : vector<8x8xi32>
    %c0_5 = arith.constant 0 : index
    %c0_6 = arith.constant 0 : index
    %12 = vector.load %arg1[%c0_5, %c0_6] : memref<2x8xi32, #tpu.memory_space<vmem>>, vector<2x8xi32>
    %c0_i32 = arith.constant 0 : i32
    %13 = vector.broadcast %c0_i32 : i32 to vector<2x8xi32>
    %14 = arith.cmpi ne, %12, %13 : vector<2x8xi32>
    %15 = vector.shape_cast %11 : vector<8x8xi1> to vector<1x8x8xi1>
    %16 = vector.shape_cast %14 : vector<2x8xi1> to vector<2x1x8xi1>
    %17 = vector.broadcast %15 : vector<1x8x8xi1> to vector<2x8x8xi1>
    %18 = vector.broadcast %16 : vector<2x1x8xi1> to vector<2x8x8xi1>
    %19 = arith.andi %17, %18 : vector<2x8x8xi1>
    %cst_7 = arith.constant 0.000000e+00 : f32
    %cst_8 = arith.constant -1.000000e+09 : f32
    %20 = vector.broadcast %cst_7 : f32 to vector<2x8x8xf32>
    %21 = vector.broadcast %cst_8 : f32 to vector<2x8x8xf32>
    %22 = arith.select %19, %20, %21 : vector<2x8x8xi1>, vector<2x8x8xf32>
    %23 = vector.extract_strided_slice %0 {offsets = [0, 0], sizes = [1, 32], strides = [1, 1]} : vector<11x32xf32> to vector<1x32xf32>
    %24 = vector.extract_strided_slice %0 {offsets = [1, 0], sizes = [1, 32], strides = [1, 1]} : vector<11x32xf32> to vector<1x32xf32>
    %cst_9 = arith.constant dense<0.000000e+00> : vector<16xf32>
    %25 = vector.multi_reduction <add>, %8, %cst_9 [1] : vector<16x32xf32> to vector<16xf32>
    %26 = vector.shape_cast %25 : vector<16xf32> to vector<16x1xf32>
    %cst_10 = arith.constant 3.200000e+01 : f32
    %27 = vector.broadcast %cst_10 : f32 to vector<16x1xf32>
    %28 = arith.divf %26, %27 : vector<16x1xf32>
    %29 = vector.broadcast %28 : vector<16x1xf32> to vector<16x32xf32>
    %30 = arith.subf %8, %29 : vector<16x32xf32>
    %31 = arith.mulf %30, %30 : vector<16x32xf32>
    %cst_11 = arith.constant dense<0.000000e+00> : vector<16xf32>
    %32 = vector.multi_reduction <add>, %31, %cst_11 [1] : vector<16x32xf32> to vector<16xf32>
    %33 = vector.shape_cast %32 : vector<16xf32> to vector<16x1xf32>
    %cst_12 = arith.constant 3.200000e+01 : f32
    %34 = vector.broadcast %cst_12 : f32 to vector<16x1xf32>
    %35 = arith.divf %33, %34 : vector<16x1xf32>
    %36 = vector.broadcast %28 : vector<16x1xf32> to vector<16x32xf32>
    %37 = arith.subf %8, %36 : vector<16x32xf32>
    %cst_13 = arith.constant 9.99999974E-6 : f32
    %38 = vector.broadcast %cst_13 : f32 to vector<16x1xf32>
    %39 = arith.addf %35, %38 : vector<16x1xf32>
    %40 = math.rsqrt %39 : vector<16x1xf32>
    %41 = vector.broadcast %40 : vector<16x1xf32> to vector<16x32xf32>
    %42 = arith.mulf %37, %41 : vector<16x32xf32>
    %43 = vector.broadcast %23 : vector<1x32xf32> to vector<16x32xf32>
    %44 = arith.mulf %42, %43 : vector<16x32xf32>
    %45 = vector.broadcast %24 : vector<1x32xf32> to vector<16x32xf32>
    %46 = arith.addf %44, %45 : vector<16x32xf32>
    %47 = arith.truncf %46 : vector<16x32xf32> to vector<16x32xbf16>
    %c0_14 = arith.constant 0 : index
    %c0_15 = arith.constant 0 : index
    %48 = vector.load %arg5[%c0_14, %c0_15] : memref<32x96xbf16, #tpu.memory_space<vmem>>, vector<32x96xbf16>
    %cst_16 = arith.constant dense<0.000000e+00> : vector<16x96xf32>
    %49 = tpu.matmul %47, %48, %cst_16 {dimension_numbers = #tpu.dot_dimension_numbers<[1], [0], [0], [1], [0, 0, 1, 1], [], []>} : vector<16x32xbf16>, vector<32x96xbf16>, vector<16x96xf32> -> vector<16x96xf32>
    %50 = vector.extract_strided_slice %49 {offsets = [0, 0], sizes = [16, 32], strides = [1, 1]} : vector<16x96xf32> to vector<16x32xf32>
    %51 = vector.extract_strided_slice %0 {offsets = [2, 0], sizes = [1, 32], strides = [1, 1]} : vector<11x32xf32> to vector<1x32xf32>
    %52 = vector.broadcast %51 : vector<1x32xf32> to vector<16x32xf32>
    %53 = arith.addf %50, %52 : vector<16x32xf32>
    %54 = vector.extract_strided_slice %49 {offsets = [0, 32], sizes = [16, 32], strides = [1, 1]} : vector<16x96xf32> to vector<16x32xf32>
    %55 = vector.extract_strided_slice %0 {offsets = [3, 0], sizes = [1, 32], strides = [1, 1]} : vector<11x32xf32> to vector<1x32xf32>
    %56 = vector.broadcast %55 : vector<1x32xf32> to vector<16x32xf32>
    %57 = arith.addf %54, %56 : vector<16x32xf32>
    %58 = vector.extract_strided_slice %49 {offsets = [0, 64], sizes = [16, 32], strides = [1, 1]} : vector<16x96xf32> to vector<16x32xf32>
    %59 = vector.extract_strided_slice %0 {offsets = [4, 0], sizes = [1, 32], strides = [1, 1]} : vector<11x32xf32> to vector<1x32xf32>
    %60 = vector.broadcast %59 : vector<1x32xf32> to vector<16x32xf32>
    %61 = arith.addf %58, %60 : vector<16x32xf32>
    %62 = vector.extract_strided_slice %53 {offsets = [0, 0], sizes = [16, 8], strides = [1, 1]} : vector<16x32xf32> to vector<16x8xf32>
    %63 = vector.shape_cast %62 : vector<16x8xf32> to vector<2x8x8xf32>
    %64 = arith.truncf %63 : vector<2x8x8xf32> to vector<2x8x8xbf16>
    %65 = vector.extract_strided_slice %57 {offsets = [0, 0], sizes = [16, 8], strides = [1, 1]} : vector<16x32xf32> to vector<16x8xf32>
    %66 = vector.shape_cast %65 : vector<16x8xf32> to vector<2x8x8xf32>
    %67 = arith.truncf %66 : vector<2x8x8xf32> to vector<2x8x8xbf16>
    %68 = vector.extract_strided_slice %61 {offsets = [0, 0], sizes = [16, 8], strides = [1, 1]} : vector<16x32xf32> to vector<16x8xf32>
    %69 = vector.shape_cast %68 : vector<16x8xf32> to vector<2x8x8xf32>
    %70 = arith.truncf %69 : vector<2x8x8xf32> to vector<2x8x8xbf16>
    "tpu.trace_start"() <{level = 10 : i32, message = "bqd,bkd->bqk"}> : () -> ()
    %cst_17 = arith.constant dense<0.000000e+00> : vector<2x8x8xf32>
    %71 = tpu.matmul %64, %67, %cst_17 {dimension_numbers = #tpu.dot_dimension_numbers<[2], [2], [1], [1], [0, 0, 0, 1, 1, 1], [0], [0]>} : vector<2x8x8xbf16>, vector<2x8x8xbf16>, vector<2x8x8xf32> -> vector<2x8x8xf32>
    "tpu.trace_stop"() : () -> ()
    %72 = arith.addf %71, %22 : vector<2x8x8xf32>
    %cst_18 = arith.constant dense<0xFF800000> : vector<2x8xf32>
    %73 = vector.multi_reduction <maximumf>, %72, %cst_18 [2] : vector<2x8x8xf32> to vector<2x8xf32>
    %74 = vector.shape_cast %73 : vector<2x8xf32> to vector<2x8x1xf32>
    %75 = vector.broadcast %74 : vector<2x8x1xf32> to vector<2x8x8xf32>
    %76 = arith.subf %72, %75 : vector<2x8x8xf32>
    %77 = math.exp %76 : vector<2x8x8xf32>
    %cst_19 = arith.constant dense<0.000000e+00> : vector<2x8xf32>
    %78 = vector.multi_reduction <add>, %77, %cst_19 [2] : vector<2x8x8xf32> to vector<2x8xf32>
    %79 = vector.shape_cast %78 : vector<2x8xf32> to vector<2x8x1xf32>
    %80 = tpu.reciprocal %79 {approx = true} : vector<2x8x1xf32> -> vector<2x8x1xf32>
    %81 = vector.broadcast %80 : vector<2x8x1xf32> to vector<2x8x8xf32>
    %82 = arith.mulf %77, %81 : vector<2x8x8xf32>
    %83 = arith.truncf %82 : vector<2x8x8xf32> to vector<2x8x8xbf16>
    "tpu.trace_start"() <{level = 10 : i32, message = "bqk,bkd->bqd"}> : () -> ()
    %cst_20 = arith.constant dense<0.000000e+00> : vector<2x8x8xf32>
    %84 = tpu.matmul %83, %70, %cst_20 {dimension_numbers = #tpu.dot_dimension_numbers<[2], [1], [1], [2], [0, 0, 0, 1, 1, 2], [0], [0]>} : vector<2x8x8xbf16>, vector<2x8x8xbf16>, vector<2x8x8xf32> -> vector<2x8x8xf32>
    "tpu.trace_stop"() : () -> ()
    %85 = vector.shape_cast %84 : vector<2x8x8xf32> to vector<16x8xf32>
    %86 = vector.extract_strided_slice %53 {offsets = [0, 8], sizes = [16, 8], strides = [1, 1]} : vector<16x32xf32> to vector<16x8xf32>
    %87 = vector.shape_cast %86 : vector<16x8xf32> to vector<2x8x8xf32>
    %88 = arith.truncf %87 : vector<2x8x8xf32> to vector<2x8x8xbf16>
    %89 = vector.extract_strided_slice %57 {offsets = [0, 8], sizes = [16, 8], strides = [1, 1]} : vector<16x32xf32> to vector<16x8xf32>
    %90 = vector.shape_cast %89 : vector<16x8xf32> to vector<2x8x8xf32>
    %91 = arith.truncf %90 : vector<2x8x8xf32> to vector<2x8x8xbf16>
    %92 = vector.extract_strided_slice %61 {offsets = [0, 8], sizes = [16, 8], strides = [1, 1]} : vector<16x32xf32> to vector<16x8xf32>
    %93 = vector.shape_cast %92 : vector<16x8xf32> to vector<2x8x8xf32>
    %94 = arith.truncf %93 : vector<2x8x8xf32> to vector<2x8x8xbf16>
    "tpu.trace_start"() <{level = 10 : i32, message = "bqd,bkd->bqk"}> : () -> ()
    %cst_21 = arith.constant dense<0.000000e+00> : vector<2x8x8xf32>
    %95 = tpu.matmul %88, %91, %cst_21 {dimension_numbers = #tpu.dot_dimension_numbers<[2], [2], [1], [1], [0, 0, 0, 1, 1, 1], [0], [0]>} : vector<2x8x8xbf16>, vector<2x8x8xbf16>, vector<2x8x8xf32> -> vector<2x8x8xf32>
    "tpu.trace_stop"() : () -> ()
    %96 = arith.addf %95, %22 : vector<2x8x8xf32>
    %cst_22 = arith.constant dense<0xFF800000> : vector<2x8xf32>
    %97 = vector.multi_reduction <maximumf>, %96, %cst_22 [2] : vector<2x8x8xf32> to vector<2x8xf32>
    %98 = vector.shape_cast %97 : vector<2x8xf32> to vector<2x8x1xf32>
    %99 = vector.broadcast %98 : vector<2x8x1xf32> to vector<2x8x8xf32>
    %100 = arith.subf %96, %99 : vector<2x8x8xf32>
    %101 = math.exp %100 : vector<2x8x8xf32>
    %cst_23 = arith.constant dense<0.000000e+00> : vector<2x8xf32>
    %102 = vector.multi_reduction <add>, %101, %cst_23 [2] : vector<2x8x8xf32> to vector<2x8xf32>
    %103 = vector.shape_cast %102 : vector<2x8xf32> to vector<2x8x1xf32>
    %104 = tpu.reciprocal %103 {approx = true} : vector<2x8x1xf32> -> vector<2x8x1xf32>
    %105 = vector.broadcast %104 : vector<2x8x1xf32> to vector<2x8x8xf32>
    %106 = arith.mulf %101, %105 : vector<2x8x8xf32>
    %107 = arith.truncf %106 : vector<2x8x8xf32> to vector<2x8x8xbf16>
    "tpu.trace_start"() <{level = 10 : i32, message = "bqk,bkd->bqd"}> : () -> ()
    %cst_24 = arith.constant dense<0.000000e+00> : vector<2x8x8xf32>
    %108 = tpu.matmul %107, %94, %cst_24 {dimension_numbers = #tpu.dot_dimension_numbers<[2], [1], [1], [2], [0, 0, 0, 1, 1, 2], [0], [0]>} : vector<2x8x8xbf16>, vector<2x8x8xbf16>, vector<2x8x8xf32> -> vector<2x8x8xf32>
    "tpu.trace_stop"() : () -> ()
    %109 = vector.shape_cast %108 : vector<2x8x8xf32> to vector<16x8xf32>
    %110 = vector.extract_strided_slice %53 {offsets = [0, 16], sizes = [16, 8], strides = [1, 1]} : vector<16x32xf32> to vector<16x8xf32>
    %111 = vector.shape_cast %110 : vector<16x8xf32> to vector<2x8x8xf32>
    %112 = arith.truncf %111 : vector<2x8x8xf32> to vector<2x8x8xbf16>
    %113 = vector.extract_strided_slice %57 {offsets = [0, 16], sizes = [16, 8], strides = [1, 1]} : vector<16x32xf32> to vector<16x8xf32>
    %114 = vector.shape_cast %113 : vector<16x8xf32> to vector<2x8x8xf32>
    %115 = arith.truncf %114 : vector<2x8x8xf32> to vector<2x8x8xbf16>
    %116 = vector.extract_strided_slice %61 {offsets = [0, 16], sizes = [16, 8], strides = [1, 1]} : vector<16x32xf32> to vector<16x8xf32>
    %117 = vector.shape_cast %116 : vector<16x8xf32> to vector<2x8x8xf32>
    %118 = arith.truncf %117 : vector<2x8x8xf32> to vector<2x8x8xbf16>
    "tpu.trace_start"() <{level = 10 : i32, message = "bqd,bkd->bqk"}> : () -> ()
    %cst_25 = arith.constant dense<0.000000e+00> : vector<2x8x8xf32>
    %119 = tpu.matmul %112, %115, %cst_25 {dimension_numbers = #tpu.dot_dimension_numbers<[2], [2], [1], [1], [0, 0, 0, 1, 1, 1], [0], [0]>} : vector<2x8x8xbf16>, vector<2x8x8xbf16>, vector<2x8x8xf32> -> vector<2x8x8xf32>
    "tpu.trace_stop"() : () -> ()
    %120 = arith.addf %119, %22 : vector<2x8x8xf32>
    %cst_26 = arith.constant dense<0xFF800000> : vector<2x8xf32>
    %121 = vector.multi_reduction <maximumf>, %120, %cst_26 [2] : vector<2x8x8xf32> to vector<2x8xf32>
    %122 = vector.shape_cast %121 : vector<2x8xf32> to vector<2x8x1xf32>
    %123 = vector.broadcast %122 : vector<2x8x1xf32> to vector<2x8x8xf32>
    %124 = arith.subf %120, %123 : vector<2x8x8xf32>
    %125 = math.exp %124 : vector<2x8x8xf32>
    %cst_27 = arith.constant dense<0.000000e+00> : vector<2x8xf32>
    %126 = vector.multi_reduction <add>, %125, %cst_27 [2] : vector<2x8x8xf32> to vector<2x8xf32>
    %127 = vector.shape_cast %126 : vector<2x8xf32> to vector<2x8x1xf32>
    %128 = tpu.reciprocal %127 {approx = true} : vector<2x8x1xf32> -> vector<2x8x1xf32>
    %129 = vector.broadcast %128 : vector<2x8x1xf32> to vector<2x8x8xf32>
    %130 = arith.mulf %125, %129 : vector<2x8x8xf32>
    %131 = arith.truncf %130 : vector<2x8x8xf32> to vector<2x8x8xbf16>
    "tpu.trace_start"() <{level = 10 : i32, message = "bqk,bkd->bqd"}> : () -> ()
    %cst_28 = arith.constant dense<0.000000e+00> : vector<2x8x8xf32>
    %132 = tpu.matmul %131, %118, %cst_28 {dimension_numbers = #tpu.dot_dimension_numbers<[2], [1], [1], [2], [0, 0, 0, 1, 1, 2], [0], [0]>} : vector<2x8x8xbf16>, vector<2x8x8xbf16>, vector<2x8x8xf32> -> vector<2x8x8xf32>
    "tpu.trace_stop"() : () -> ()
    %133 = vector.shape_cast %132 : vector<2x8x8xf32> to vector<16x8xf32>
    %134 = vector.extract_strided_slice %53 {offsets = [0, 24], sizes = [16, 8], strides = [1, 1]} : vector<16x32xf32> to vector<16x8xf32>
    %135 = vector.shape_cast %134 : vector<16x8xf32> to vector<2x8x8xf32>
    %136 = arith.truncf %135 : vector<2x8x8xf32> to vector<2x8x8xbf16>
    %137 = vector.extract_strided_slice %57 {offsets = [0, 24], sizes = [16, 8], strides = [1, 1]} : vector<16x32xf32> to vector<16x8xf32>
    %138 = vector.shape_cast %137 : vector<16x8xf32> to vector<2x8x8xf32>
    %139 = arith.truncf %138 : vector<2x8x8xf32> to vector<2x8x8xbf16>
    %140 = vector.extract_strided_slice %61 {offsets = [0, 24], sizes = [16, 8], strides = [1, 1]} : vector<16x32xf32> to vector<16x8xf32>
    %141 = vector.shape_cast %140 : vector<16x8xf32> to vector<2x8x8xf32>
    %142 = arith.truncf %141 : vector<2x8x8xf32> to vector<2x8x8xbf16>
    "tpu.trace_start"() <{level = 10 : i32, message = "bqd,bkd->bqk"}> : () -> ()
    %cst_29 = arith.constant dense<0.000000e+00> : vector<2x8x8xf32>
    %143 = tpu.matmul %136, %139, %cst_29 {dimension_numbers = #tpu.dot_dimension_numbers<[2], [2], [1], [1], [0, 0, 0, 1, 1, 1], [0], [0]>} : vector<2x8x8xbf16>, vector<2x8x8xbf16>, vector<2x8x8xf32> -> vector<2x8x8xf32>
    "tpu.trace_stop"() : () -> ()
    %144 = arith.addf %143, %22 : vector<2x8x8xf32>
    %cst_30 = arith.constant dense<0xFF800000> : vector<2x8xf32>
    %145 = vector.multi_reduction <maximumf>, %144, %cst_30 [2] : vector<2x8x8xf32> to vector<2x8xf32>
    %146 = vector.shape_cast %145 : vector<2x8xf32> to vector<2x8x1xf32>
    %147 = vector.broadcast %146 : vector<2x8x1xf32> to vector<2x8x8xf32>
    %148 = arith.subf %144, %147 : vector<2x8x8xf32>
    %149 = math.exp %148 : vector<2x8x8xf32>
    %cst_31 = arith.constant dense<0.000000e+00> : vector<2x8xf32>
    %150 = vector.multi_reduction <add>, %149, %cst_31 [2] : vector<2x8x8xf32> to vector<2x8xf32>
    %151 = vector.shape_cast %150 : vector<2x8xf32> to vector<2x8x1xf32>
    %152 = tpu.reciprocal %151 {approx = true} : vector<2x8x1xf32> -> vector<2x8x1xf32>
    %153 = vector.broadcast %152 : vector<2x8x1xf32> to vector<2x8x8xf32>
    %154 = arith.mulf %149, %153 : vector<2x8x8xf32>
    %155 = arith.truncf %154 : vector<2x8x8xf32> to vector<2x8x8xbf16>
    "tpu.trace_start"() <{level = 10 : i32, message = "bqk,bkd->bqd"}> : () -> ()
    %cst_32 = arith.constant dense<0.000000e+00> : vector<2x8x8xf32>
    %156 = tpu.matmul %155, %142, %cst_32 {dimension_numbers = #tpu.dot_dimension_numbers<[2], [1], [1], [2], [0, 0, 0, 1, 1, 2], [0], [0]>} : vector<2x8x8xbf16>, vector<2x8x8xbf16>, vector<2x8x8xf32> -> vector<2x8x8xf32>
    "tpu.trace_stop"() : () -> ()
    %157 = vector.shape_cast %156 : vector<2x8x8xf32> to vector<16x8xf32>
    %158 = tpu.concatenate %85, %109, %133, %157 in 1 : vector<16x8xf32>, vector<16x8xf32>, vector<16x8xf32>, vector<16x8xf32> -> vector<16x32xf32>
    %159 = arith.truncf %158 : vector<16x32xf32> to vector<16x32xbf16>
    %c0_33 = arith.constant 0 : index
    %c0_34 = arith.constant 0 : index
    %160 = vector.load %arg6[%c0_33, %c0_34] : memref<32x32xbf16, #tpu.memory_space<vmem>>, vector<32x32xbf16>
    %cst_35 = arith.constant dense<0.000000e+00> : vector<16x32xf32>
    %161 = tpu.matmul %159, %160, %cst_35 {dimension_numbers = #tpu.dot_dimension_numbers<[1], [0], [0], [1], [0, 0, 1, 1], [], []>} : vector<16x32xbf16>, vector<32x32xbf16>, vector<16x32xf32> -> vector<16x32xf32>
    %162 = arith.addf %8, %161 : vector<16x32xf32>
    %163 = vector.extract_strided_slice %0 {offsets = [5, 0], sizes = [1, 32], strides = [1, 1]} : vector<11x32xf32> to vector<1x32xf32>
    %164 = vector.broadcast %163 : vector<1x32xf32> to vector<16x32xf32>
    %165 = arith.addf %162, %164 : vector<16x32xf32>
    %166 = vector.extract_strided_slice %0 {offsets = [6, 0], sizes = [1, 32], strides = [1, 1]} : vector<11x32xf32> to vector<1x32xf32>
    %167 = vector.extract_strided_slice %0 {offsets = [7, 0], sizes = [1, 32], strides = [1, 1]} : vector<11x32xf32> to vector<1x32xf32>
    %cst_36 = arith.constant dense<0.000000e+00> : vector<16xf32>
    %168 = vector.multi_reduction <add>, %165, %cst_36 [1] : vector<16x32xf32> to vector<16xf32>
    %169 = vector.shape_cast %168 : vector<16xf32> to vector<16x1xf32>
    %cst_37 = arith.constant 3.200000e+01 : f32
    %170 = vector.broadcast %cst_37 : f32 to vector<16x1xf32>
    %171 = arith.divf %169, %170 : vector<16x1xf32>
    %172 = vector.broadcast %171 : vector<16x1xf32> to vector<16x32xf32>
    %173 = arith.subf %165, %172 : vector<16x32xf32>
    %174 = arith.mulf %173, %173 : vector<16x32xf32>
    %cst_38 = arith.constant dense<0.000000e+00> : vector<16xf32>
    %175 = vector.multi_reduction <add>, %174, %cst_38 [1] : vector<16x32xf32> to vector<16xf32>
    %176 = vector.shape_cast %175 : vector<16xf32> to vector<16x1xf32>
    %cst_39 = arith.constant 3.200000e+01 : f32
    %177 = vector.broadcast %cst_39 : f32 to vector<16x1xf32>
    %178 = arith.divf %176, %177 : vector<16x1xf32>
    %179 = vector.broadcast %171 : vector<16x1xf32> to vector<16x32xf32>
    %180 = arith.subf %165, %179 : vector<16x32xf32>
    %cst_40 = arith.constant 9.99999974E-6 : f32
    %181 = vector.broadcast %cst_40 : f32 to vector<16x1xf32>
    %182 = arith.addf %178, %181 : vector<16x1xf32>
    %183 = math.rsqrt %182 : vector<16x1xf32>
    %184 = vector.broadcast %183 : vector<16x1xf32> to vector<16x32xf32>
    %185 = arith.mulf %180, %184 : vector<16x32xf32>
    %186 = vector.broadcast %166 : vector<1x32xf32> to vector<16x32xf32>
    %187 = arith.mulf %185, %186 : vector<16x32xf32>
    %188 = vector.broadcast %167 : vector<1x32xf32> to vector<16x32xf32>
    %189 = arith.addf %187, %188 : vector<16x32xf32>
    %190 = arith.truncf %189 : vector<16x32xf32> to vector<16x32xbf16>
    %c0_41 = arith.constant 0 : index
    %c0_42 = arith.constant 0 : index
    %191 = vector.load %arg7[%c0_41, %c0_42] : memref<32x128xbf16, #tpu.memory_space<vmem>>, vector<32x128xbf16>
    %cst_43 = arith.constant dense<0.000000e+00> : vector<16x128xf32>
    %192 = tpu.matmul %190, %191, %cst_43 {dimension_numbers = #tpu.dot_dimension_numbers<[1], [0], [0], [1], [0, 0, 1, 1], [], []>} : vector<16x32xbf16>, vector<32x128xbf16>, vector<16x128xf32> -> vector<16x128xf32>
    %c0_44 = arith.constant 0 : index
    %c0_45 = arith.constant 0 : index
    %193 = vector.load %arg4[%c0_44, %c0_45] : memref<1x128xf32, #tpu.memory_space<vmem>>, vector<1x128xf32>
    %194 = vector.broadcast %193 : vector<1x128xf32> to vector<16x128xf32>
    %195 = arith.addf %192, %194 : vector<16x128xf32>
    %cst_46 = arith.constant 5.000000e-01 : f32
    %196 = vector.broadcast %cst_46 : f32 to vector<16x128xf32>
    %197 = arith.mulf %196, %195 : vector<16x128xf32>
    %cst_47 = arith.constant 4.471500e-02 : f32
    %198 = vector.broadcast %cst_47 : f32 to vector<16x128xf32>
    %199 = arith.mulf %198, %195 : vector<16x128xf32>
    %200 = arith.mulf %199, %195 : vector<16x128xf32>
    %201 = arith.mulf %200, %195 : vector<16x128xf32>
    %202 = arith.addf %195, %201 : vector<16x128xf32>
    %cst_48 = arith.constant 0.797884583 : f32
    %203 = vector.broadcast %cst_48 : f32 to vector<16x128xf32>
    %204 = arith.mulf %203, %202 : vector<16x128xf32>
    %205 = math.tanh %204 : vector<16x128xf32>
    %cst_49 = arith.constant 1.000000e+00 : f32
    %206 = vector.broadcast %cst_49 : f32 to vector<16x128xf32>
    %207 = arith.addf %206, %205 : vector<16x128xf32>
    %208 = arith.mulf %197, %207 : vector<16x128xf32>
    %209 = arith.truncf %208 : vector<16x128xf32> to vector<16x128xbf16>
    %c0_50 = arith.constant 0 : index
    %c0_51 = arith.constant 0 : index
    %210 = vector.load %arg8[%c0_50, %c0_51] : memref<128x32xbf16, #tpu.memory_space<vmem>>, vector<128x32xbf16>
    %cst_52 = arith.constant dense<0.000000e+00> : vector<16x32xf32>
    %211 = tpu.matmul %209, %210, %cst_52 {dimension_numbers = #tpu.dot_dimension_numbers<[1], [0], [0], [1], [0, 0, 1, 1], [], []>} : vector<16x128xbf16>, vector<128x32xbf16>, vector<16x32xf32> -> vector<16x32xf32>
    %212 = vector.extract_strided_slice %0 {offsets = [8, 0], sizes = [1, 32], strides = [1, 1]} : vector<11x32xf32> to vector<1x32xf32>
    %213 = vector.broadcast %212 : vector<1x32xf32> to vector<16x32xf32>
    %214 = arith.addf %211, %213 : vector<16x32xf32>
    %215 = arith.addf %165, %214 : vector<16x32xf32>
    %216 = vector.extract_strided_slice %0 {offsets = [9, 0], sizes = [1, 32], strides = [1, 1]} : vector<11x32xf32> to vector<1x32xf32>
    %217 = vector.extract_strided_slice %0 {offsets = [10, 0], sizes = [1, 32], strides = [1, 1]} : vector<11x32xf32> to vector<1x32xf32>
    %cst_53 = arith.constant dense<0.000000e+00> : vector<16xf32>
    %218 = vector.multi_reduction <add>, %215, %cst_53 [1] : vector<16x32xf32> to vector<16xf32>
    %219 = vector.shape_cast %218 : vector<16xf32> to vector<16x1xf32>
    %cst_54 = arith.constant 3.200000e+01 : f32
    %220 = vector.broadcast %cst_54 : f32 to vector<16x1xf32>
    %221 = arith.divf %219, %220 : vector<16x1xf32>
    %222 = vector.broadcast %221 : vector<16x1xf32> to vector<16x32xf32>
    %223 = arith.subf %215, %222 : vector<16x32xf32>
    %224 = arith.mulf %223, %223 : vector<16x32xf32>
    %cst_55 = arith.constant dense<0.000000e+00> : vector<16xf32>
    %225 = vector.multi_reduction <add>, %224, %cst_55 [1] : vector<16x32xf32> to vector<16xf32>
    %226 = vector.shape_cast %225 : vector<16xf32> to vector<16x1xf32>
    %cst_56 = arith.constant 3.200000e+01 : f32
    %227 = vector.broadcast %cst_56 : f32 to vector<16x1xf32>
    %228 = arith.divf %226, %227 : vector<16x1xf32>
    %229 = vector.broadcast %221 : vector<16x1xf32> to vector<16x32xf32>
    %230 = arith.subf %215, %229 : vector<16x32xf32>
    %cst_57 = arith.constant 9.99999974E-6 : f32
    %231 = vector.broadcast %cst_57 : f32 to vector<16x1xf32>
    %232 = arith.addf %228, %231 : vector<16x1xf32>
    %233 = math.rsqrt %232 : vector<16x1xf32>
    %234 = vector.broadcast %233 : vector<16x1xf32> to vector<16x32xf32>
    %235 = arith.mulf %230, %234 : vector<16x32xf32>
    %236 = vector.broadcast %216 : vector<1x32xf32> to vector<16x32xf32>
    %237 = arith.mulf %235, %236 : vector<16x32xf32>
    %238 = vector.broadcast %217 : vector<1x32xf32> to vector<16x32xf32>
    %239 = arith.addf %237, %238 : vector<16x32xf32>
    %240 = arith.truncf %239 : vector<16x32xf32> to vector<16x32xbf16>
    %c0_58 = arith.constant 0 : index
    %c0_59 = arith.constant 0 : index
    %241 = vector.load %arg9[%c0_58, %c0_59] : memref<32x128xbf16, #tpu.memory_space<vmem>>, vector<32x128xbf16>
    %cst_60 = arith.constant dense<0.000000e+00> : vector<16x128xf32>
    %242 = tpu.matmul %240, %241, %cst_60 {dimension_numbers = #tpu.dot_dimension_numbers<[1], [0], [0], [1], [0, 0, 1, 1], [], []>} : vector<16x32xbf16>, vector<32x128xbf16>, vector<16x128xf32> -> vector<16x128xf32>
    %c0_61 = arith.constant 0 : index
    %c0_62 = arith.constant 0 : index
    %243 = vector.load %arg10[%c0_61, %c0_62] : memref<16x128xf32, #tpu.memory_space<vmem>>, vector<16x128xf32>
    tpu.vector_store %arg10[%c0_61, %c0_62], %242 {strides = array<i32>} : memref<16x128xf32, #tpu.memory_space<vmem>>, vector<16x128xf32>,
    return
  }
}

</mosaic_0001>

<llo_original>
// kernel: text_generation_logits.1
$region0: #{text_generation_logits.1}
  #allocation0 [shape = 'u32[]', space=smem, size = 0x4, offset = 0x4, fixed_abs, tag = 'smem constant byte address 0x4 - core index']
  #allocation1 [shape = 'u32[144,128]{1,0:T(1,128)}', space=vmem, size = 0x12000, scoped, tag = 'internal scratch']
  %s0 = inlined_call_operand.vmem [shape: s32[16,1], index: 0, kind: input, shape index: {}]
  %s1 = inlined_call_operand.vmem [shape: s32[2,8], index: 1, kind: input, shape index: {}]
  %s2 = inlined_call_operand.vmem [shape: f32[64,32], index: 2, kind: input, shape index: {}]
  %s3 = inlined_call_operand.vmem [shape: f32[11,32], index: 3, kind: input, shape index: {}]
  %s4 = inlined_call_operand.vmem [shape: f32[1,128], index: 4, kind: input, shape index: {}]
  %s5 = inlined_call_operand.vmem [shape: bf16[32,96], index: 5, kind: input, shape index: {}]
  %s6 = inlined_call_operand.vmem [shape: bf16[32,32], index: 6, kind: input, shape index: {}]
  %s7 = inlined_call_operand.vmem [shape: bf16[32,128], index: 7, kind: input, shape index: {}]
  %s8 = inlined_call_operand.vmem [shape: bf16[128,32], index: 8, kind: input, shape index: {}]
  %s9 = inlined_call_operand.vmem [shape: bf16[32,128], index: 9, kind: input, shape index: {}]
  %s10 = inlined_call_operand.hbm [shape: f32[16,128], index: 10, kind: output, shape index: {}]
  %s11 = sld [smem:[#allocation0]]
  $region50: #{text_generation_logits.1} parent=0
    _
  %s13 = ssub.s32 1, %s11
  %s14 = scalar_select 0, %s13, %s11
  $region1: #{text_generation_logits.1} parent=0
    #allocation2 [shape = 'u8[8192]{0}', space=vmem, size = 0x2000, scoped, tag = 'output window, operand 0, single buffered']
    #allocation3 [shape = 's32[1]{0}', space=sflag, size = 0x4, scoped, tag = 'scoped memory for text_generation_logits.1']
    %15 = vsyncpa [#allocation3], 0
    // Predicated region
    $region2: #{text_generation_logits.1} parent=1 // pred_check
      _
    $region3: #{text_generation_logits.1} parent=1 // pred_check_branch
      %17 = sbr.rel (0) target = $region5
    $region4: #{text_generation_logits.1} parent=1 // pred_region
      _
    $region5: #{text_generation_logits.1} parent=1 // pred_fallthru
      _
    // Predicated region
    $region6: #{text_generation_logits.1} parent=1 // pred_check
      _
    $region7: #{text_generation_logits.1} parent=1 // pred_check_branch
      %19 = sbr.rel (0) target = $region9
    $region8: #{text_generation_logits.1} parent=1 // pred_region
      _
    $region9: #{text_generation_logits.1} parent=1 // pred_fallthru
      _
    // Predicated region
    $region10: #{text_generation_logits.1} parent=1 // pred_check
      _
    $region11: #{text_generation_logits.1} parent=1 // pred_check_branch
      %21 = sbr.rel (0) target = $region13
    $region12: #{text_generation_logits.1} parent=1 // pred_region
      _
    $region13: #{text_generation_logits.1} parent=1 // pred_fallthru
      _
    // Predicated region
    $region14: #{text_generation_logits.1} parent=1 // pred_check
      _
    $region15: #{text_generation_logits.1} parent=1 // pred_check_branch
      %23 = sbr.rel (0) target = $region17
    $region16: #{text_generation_logits.1} parent=1 // pred_region
      _
    $region17: #{text_generation_logits.1} parent=1 // pred_fallthru
      _
    // Predicated region
    $region18: #{text_generation_logits.1} parent=1 // pred_check
      _
    $region19: #{text_generation_logits.1} parent=1 // pred_check_branch
      %25 = sbr.rel (0) target = $region21
    $region20: #{text_generation_logits.1} parent=1 // pred_region
      _
    $region21: #{text_generation_logits.1} parent=1 // pred_fallthru
      _
    // Predicated region
    $region22: #{text_generation_logits.1} parent=1 // pred_check
      _
    $region23: #{text_generation_logits.1} parent=1 // pred_check_branch
      %27 = sbr.rel (0) target = $region25
    $region24: #{text_generation_logits.1} parent=1 // pred_region
      _
    $region25: #{text_generation_logits.1} parent=1 // pred_fallthru
      _
    // Predicated region
    $region26: #{text_generation_logits.1} parent=1 // pred_check
      _
    $region27: #{text_generation_logits.1} parent=1 // pred_check_branch
      %29 = sbr.rel (0) target = $region29
    $region28: #{text_generation_logits.1} parent=1 // pred_region
      _
    $region29: #{text_generation_logits.1} parent=1 // pred_fallthru
      _
    // Predicated region
    $region30: #{text_generation_logits.1} parent=1 // pred_check
      _
    $region31: #{text_generation_logits.1} parent=1 // pred_check_branch
      %31 = sbr.rel (0) target = $region33
    $region32: #{text_generation_logits.1} parent=1 // pred_region
      _
    $region33: #{text_generation_logits.1} parent=1 // pred_fallthru
      _
    // Predicated region
    $region34: #{text_generation_logits.1} parent=1 // pred_check
      _
    $region35: #{text_generation_logits.1} parent=1 // pred_check_branch
      %33 = sbr.rel (0) target = $region37
    $region36: #{text_generation_logits.1} parent=1 // pred_region
      _
    $region37: #{text_generation_logits.1} parent=1 // pred_fallthru
      _
    // Predicated region
    $region38: #{text_generation_logits.1} parent=1 // pred_check
      _
    $region39: #{text_generation_logits.1} parent=1 // pred_check_branch
      %35 = sbr.rel (0) target = $region41
    $region40: #{text_generation_logits.1} parent=1 // pred_region
      _
    $region41: #{text_generation_logits.1} parent=1 // pred_fallthru
      _
    %v37 = vld [vmem:[%s3] sm:$0xff]
    %v38 = vld [vmem:[%s3 + $0x8] sm:$0x7]
    %v39 = vld [vmem:[%s0] sm:$0xff]
    %v40 = vld [vmem:[%s0 + $0x8] sm:$0xff]
    %v41 = vlaneseq
    %v42 = vand.u32 %v41, 127
    %43 = vset.pattern.permute.xlu0 0
    %44 = vperm.xlu0 %43, %v39
    %v45 = vpop.permute.xlu0 %44
    %46 = vset.pattern.permute.xlu0 0
    %47 = vperm.xlu0 %46, %v40
    %v48 = vpop.permute.xlu0 %47
    %vm49 = vcmp.eq.s32.totalorder %v45, %v42
    %vm50 = vcmp.eq.s32.totalorder %v48, %v42
    %v51 = vsel %vm49, 1, 0
    %v52 = vsel %vm50, 1, 0
    %v53 = vcvt.s32.f32 %v51
    %v54 = vcvt.s32.f32 %v52
    %v55 = vld [vmem:[%s2] sm:$0xff]
    %v56 = vld [vmem:[%s2 + $0x8] sm:$0xff]
    %v57 = vld [vmem:[%s2 + $0x10] sm:$0xff]
    %v58 = vld [vmem:[%s2 + $0x18] sm:$0xff]
    %v59 = vld [vmem:[%s2 + $0x20] sm:$0xff]
    %v60 = vld [vmem:[%s2 + $0x28] sm:$0xff]
    %v61 = vld [vmem:[%s2 + $0x30] sm:$0xff]
    %v62 = vld [vmem:[%s2 + $0x38] sm:$0xff]
    %vm63 = vcmask 523264
    %v65 = vsel %vm63, %v53, 0
    %v68 = vsel %vm63, %v54, 0
    %70 = vmatprep.subr.mxu0 0.0
    %71 = vmatpush1.msra.mxu0 0.0
    %72 = vmatprep.subr.mxu0 0.0
    %73 = vmatpush1.msra.mxu0 0.0
    %74 = vmatprep.subr.mxu0 0.0
    %75 = vmatpush1.msra.mxu0 0.0
    %76 = vmatprep.subr.mxu0 0.0
    %77 = vmatpush1.msra.mxu0 0.0
    %78 = vmatprep.subr.mxu0 0.0
    %79 = vmatpush1.msra.mxu0 0.0
    %80 = vmatprep.subr.mxu0 0.0
    %81 = vmatpush1.msra.mxu0 0.0
    %82 = vmatprep.subr.mxu0 0.0
    %83 = vmatpush1.msra.mxu0 0.0
    %84 = vmatprep.subr.mxu0 0.0
    %85 = vmatpush1.msra.mxu0 0.0
    %86 = vmatprep.subr.mxu0 0.0
    %87 = vmatpush1.msra.mxu0 %v62
    %88 = vmatprep.subr.mxu0 0.0
    %89 = vmatpush1.msra.mxu0 %v61
    %90 = vmatprep.subr.mxu0 0.0
    %91 = vmatpush1.msra.mxu0 %v60
    %92 = vmatprep.subr.mxu0 0.0
    %93 = vmatpush1.msra.mxu0 %v59
    %94 = vmatprep.subr.mxu0 0.0
    %95 = vmatpush1.msra.mxu0 %v58
    %96 = vmatprep.subr.mxu0 0.0
    %97 = vmatpush1.msra.mxu0 %v57
    %98 = vmatprep.subr.mxu0 0.0
    %99 = vmatpush1.msra.mxu0 %v56
    %100 = vmatprep.subr.mxu0 0.0
    %101 = vmatpush1.msra.mxu0 %v55
    %102 = vmatprep.subr.mxu0 0.0
    %103 = vmatpush2.msra.mxu0 0.0
    %104 = vmatprep.subr.mxu0 0.0
    %105 = vmatpush2.msra.mxu0 0.0
    %106 = vmatprep.subr.mxu0 0.0
    %107 = vmatpush2.msra.mxu0 0.0
    %108 = vmatprep.subr.mxu0 0.0
    %109 = vmatpush2.msra.mxu0 0.0
    %110 = vmatprep.subr.mxu0 0.0
    %111 = vmatpush2.msra.mxu0 0.0
    %112 = vmatprep.subr.mxu0 0.0
    %113 = vmatpush2.msra.mxu0 0.0
    %114 = vmatprep.subr.mxu0 0.0
    %115 = vmatpush2.msra.mxu0 0.0
    %116 = vmatprep.subr.mxu0 0.0
    %117 = vmatpush2.msra.mxu0 0.0
    %118 = vmatprep.subr.mxu0 0.0
    %119 = vmatpush2.msra.mxu0 0.0
    %120 = vmatprep.subr.mxu0 0.0
    %121 = vmatpush2.msra.mxu0 0.0
    %122 = vmatprep.subr.mxu0 0.0
    %123 = vmatpush2.msra.mxu0 0.0
    %124 = vmatprep.subr.mxu0 0.0
    %125 = vmatpush2.msra.mxu0 0.0
    %126 = vmatprep.subr.mxu0 0.0
    %127 = vmatpush2.msra.mxu0 0.0
    %128 = vmatprep.subr.mxu0 0.0
    %129 = vmatpush2.msra.mxu0 0.0
    %130 = vmatprep.subr.mxu0 0.0
    %131 = vmatpush2.msra.mxu0 0.0
    %132 = vmatprep.subr.mxu0 0.0
    %133 = vmatpush2.msra.mxu0 0.0
    %134 = vmatprep.mubr.f32.mxu0 0.0
    %135 = vmatmul.mubr.f32.gmra.mxu0 %v65
    %v136 = vpop.f32.mrf.mxu0
    %v137 = vadd.f32 0.0, %v136
    %v138 = vpop.f32.mrf.mxu0
    %139 = vmatprep.mubr.f32.mxu0 0.0
    %140 = vmatmul.mubr.f32.gmra.mxu0 %v68
    %v141 = vpop.f32.mrf.mxu0
    %v142 = vadd.f32 0.0, %v141
    %v143 = vpop.f32.mrf.mxu0
    %144 = vdwg.mxu0
    %v145 = vlaneseq
    %v146 = vshrl.u32 %v145, 7
    %vm147 = vcmp.le.s32.totalorder %v42, %v146
    %v148 = vld [vmem:[%s1] sm:$0x3]
    %vm149 = vcmp.ne.s32.totalorder %v148, 0
    %v150 = vsel %vm149, 1, 0
    %v152 = vunpack.c.l.s4 1966171168
    %v153 = vunpack.c.0.s8 %v152
    %v154 = vlaneseq
    %v155 = vshrl.u32 %v154, 7
    %v156 = vsub.s32 %v153, %v155
    %v157 = vrot.slane %v150, %v156
    %v158 = vcombine.high %v157, %v157
    %v160 = vunpack.c.l.s4 1966171168
    %v161 = vunpack.c.0.s8 %v160
    %v162 = vlaneseq
    %v163 = vshrl.u32 %v162, 7
    %v164 = vsub.s32 %v161, %v163
    %v165 = vrot.slane %v157, %v164
    %v167 = vunpack.c.l.s4 1966171168
    %v168 = vunpack.c.0.s8 %v167
    %v169 = vlaneseq
    %v170 = vshrl.u32 %v169, 7
    %v171 = vsub.s32 %v168, %v170
    %v172 = vrot.slane %v158, %v171
    %vm173 = vcmp.ne.s32.totalorder %v165, 0
    %vm174 = vcmp.ne.s32.totalorder %v172, 0
    %v175 = vsel %vm147, 1, 0
    %vm176 = vcmp.eq.s32.totalorder %v175, 1
    %v177 = vsel %vm173, 1, 0
    %v178 = vsel %vm174, 1, 0
    %v179 = vlaneseq
    %v180 = vshrl.u32 %v179, 7
    %v181 = vsub.s32 0, %v180
    %v182 = vrot.slane %v177, %v181
    %v183 = vlaneseq
    %v184 = vshrl.u32 %v183, 7
    %v185 = vsub.s32 0, %v184
    %v186 = vrot.slane %v178, %v185
    %vm187 = vcmp.eq.s32.totalorder %v182, 1
    %vm188 = vcmp.eq.s32.totalorder %v186, 1
    %vm189 = vmand %vm176, %vm187
    %vm190 = vmand %vm176, %vm188
    %v191 = vsel %vm189, 0.0, -1e+09
    %v192 = vsel %vm190, 0.0, -1e+09
    %vm193 = vcmask 261120
    %v194 = vsel %vm193, %v137, 0.0
    %195 = vadd.xlane.f32.xlu0 %v194
    %v196 = vpop.xlane.xlu0 %195
    %v197 = vsel %vm193, %v142, 0.0
    %198 = vadd.xlane.f32.xlu0 %v197
    %v199 = vpop.xlane.xlu0 %198
    %v200 = vrcp.pop 32.0
    %v201 = vmul.f32 %v196, %v200
    %v202 = vmul.f32 %v199, %v200
    %v203 = vsub.f32 %v137, %v201
    %v204 = vsub.f32 %v142, %v202
    %v205 = vmul.f32 %v203, %v203
    %v206 = vmul.f32 %v204, %v204
    %v207 = vsel %vm193, %v205, 0.0
    %208 = vadd.xlane.f32.xlu0 %v207
    %v209 = vpop.xlane.xlu0 %208
    %v210 = vsel %vm193, %v206, 0.0
    %211 = vadd.xlane.f32.xlu0 %v210
    %v212 = vpop.xlane.xlu0 %211
    %v213 = vmul.f32 %v209, %v200
    %v214 = vmul.f32 %v212, %v200
    %v215 = vadd.f32 %v213, 1e-05
    %v216 = vadd.f32 %v214, 1e-05
    %v217 = vrsqrt.pop %v215
    %v218 = vrsqrt.pop %v216
    %v219 = vmul.f32 %v203, %v217
    %v220 = vmul.f32 %v204, %v218
    %v221 = vlaneseq
    %v222 = vshrl.u32 %v221, 7
    %v223 = vsub.s32 0, %v222
    %v224 = vrot.slane %v37, %v223
    %v225 = vmul.f32 %v219, %v224
    %v226 = vmul.f32 %v220, %v224
    %v227 = vlaneseq
    %v228 = vshrl.u32 %v227, 7
    %v229 = vsub.s32 1, %v228
    %v230 = vrot.slane %v37, %v229
    %v231 = vadd.f32 %v225, %v230
    %v232 = vadd.f32 %v226, %v230
    %v233 = vpack.c.bf16 %v232, %v231
    %v234 = vld [vmem:[%s5] sm:$0xf]
    %v235 = vld [vmem:[%s5 + $0x4] sm:$0xf]
    %v236 = vld [vmem:[%s5 + $0x8] sm:$0xf]
    %v237 = vld [vmem:[%s5 + $0xc] sm:$0xf]
    %v242 = vunpack.c.l.b16 %v234
    %v243 = vunpack.c.l.b16 %v235
    %v244 = vunpack.c.l.b16 %v236
    %v245 = vunpack.c.l.b16 %v237
    %v246 = vpack.c.b16 %v243, %v242
    %v247 = vpack.c.b16 %v245, %v244
    %v251 = vsel %vm193, %v233, 0
    %253 = vmatprep.subr.bf16.mxu0 0
    %254 = vmatpush1.bf16.msra.mxu0 0
    %255 = vmatprep.subr.bf16.mxu0 0
    %256 = vmatpush1.bf16.msra.mxu0 0
    %257 = vmatprep.subr.bf16.mxu0 0
    %258 = vmatpush1.bf16.msra.mxu0 0
    %259 = vmatprep.subr.bf16.mxu0 0
    %260 = vmatpush1.bf16.msra.mxu0 0
    %261 = vmatprep.subr.bf16.mxu0 0
    %262 = vmatpush1.bf16.msra.mxu0 0
    %263 = vmatprep.subr.bf16.mxu0 0
    %264 = vmatpush1.bf16.msra.mxu0 0
    %265 = vmatprep.subr.bf16.mxu0 0
    %266 = vmatpush1.bf16.msra.mxu0 %v247
    %267 = vmatprep.subr.bf16.mxu0 0
    %268 = vmatpush1.bf16.msra.mxu0 %v246
    %269 = vmatprep.subr.bf16.mxu0 0
    %270 = vmatpush2.bf16.msra.mxu0 0
    %271 = vmatprep.subr.bf16.mxu0 0
    %272 = vmatpush2.bf16.msra.mxu0 0
    %273 = vmatprep.subr.bf16.mxu0 0
    %274 = vmatpush2.bf16.msra.mxu0 0
    %275 = vmatprep.subr.bf16.mxu0 0
    %276 = vmatpush2.bf16.msra.mxu0 0
    %277 = vmatprep.subr.bf16.mxu0 0
    %278 = vmatpush2.bf16.msra.mxu0 0
    %279 = vmatprep.subr.bf16.mxu0 0
    %280 = vmatpush2.bf16.msra.mxu0 0
    %281 = vmatprep.subr.bf16.mxu0 0
    %282 = vmatpush2.bf16.msra.mxu0 0
    %283 = vmatprep.subr.bf16.mxu0 0
    %284 = vmatpush2.bf16.msra.mxu0 0
    %285 = vmatprep.mubr.bf16.mxu0 0
    %286 = vmatmul.mubr.bf16.gmra.mxu0 %v251
    %v287 = vpop.f32.mrf.mxu0
    %v288 = vadd.f32 0.0, %v287
    %v289 = vpop.f32.mrf.mxu0
    %v290 = vpop.f32.mrf.mxu0
    %v291 = vadd.f32 0.0, %v290
    %v292 = vpop.f32.mrf.mxu0
    %293 = vdwg.mxu0
    %v294 = vlaneseq
    %v295 = vshrl.u32 %v294, 7
    %v296 = vsub.s32 2, %v295
    %v297 = vrot.slane %v37, %v296
    %v298 = vadd.f32 %v288, %v297
    %v299 = vadd.f32 %v291, %v297
    %v300 = vlaneseq
    %v301 = vshrl.u32 %v300, 7
    %v302 = vsub.s32 3, %v301
    %v303 = vrot.slane %v37, %v302
    %305 = vrot.lane.b32.xlu0 %v303, 32
    %v306 = vpop.permute.xlu0 %305
    %v308 = vadd.f32 %v288, %v306
    %v309 = vadd.f32 %v291, %v306
    %v310 = vlaneseq
    %v311 = vshrl.u32 %v310, 7
    %v312 = vsub.s32 4, %v311
    %v313 = vrot.slane %v37, %v312
    %315 = vrot.lane.b32.xlu0 %v313, 64
    %v316 = vpop.permute.xlu0 %315
    %v318 = vadd.f32 %v288, %v316
    %v319 = vadd.f32 %v291, %v316
    %v320 = vpack.c.bf16 %v298, %v298
    %v321 = vpack.c.bf16 %v299, %v299
    %v322 = vpack.c.bf16 %v308, %v308
    %v323 = vpack.c.bf16 %v309, %v309
    %v324 = vpack.c.bf16 %v318, %v318
    %v325 = vpack.c.bf16 %v319, %v319
    %327 = vrot.lane.b32.xlu0 %v322, 96
    %v328 = vpop.permute.xlu0 %327
    %vm329 = vcmask 64512
    %v331 = vsel %vm329, %v320, 0
    %v334 = vsel %vm329, %v328, 0
    %336 = vmatprep.subr.bf16.mxu0 0
    %337 = vmatpush1.bf16.xpose.msra.mxu0 0
    %338 = vmatprep.subr.bf16.mxu0 0
    %339 = vmatpush1.bf16.xpose.msra.mxu0 0
    %340 = vmatprep.subr.bf16.mxu0 0
    %341 = vmatpush1.bf16.xpose.msra.mxu0 0
    %342 = vmatprep.subr.bf16.mxu0 0
    %343 = vmatpush1.bf16.xpose.msra.mxu0 0
    %344 = vmatprep.subr.bf16.mxu0 0
    %345 = vmatpush1.bf16.xpose.msra.mxu0 0
    %346 = vmatprep.subr.bf16.mxu0 0
    %347 = vmatpush1.bf16.xpose.msra.mxu0 0
    %348 = vmatprep.subr.bf16.mxu0 0
    %349 = vmatpush1.bf16.xpose.msra.mxu0 0
    %350 = vmatprep.subr.bf16.mxu0 0
    %351 = vmatpush1.bf16.xpose.msra.mxu0 %v334
    %352 = vmatprep.subr.bf16.mxu0 0
    %353 = vmatpush2.bf16.xpose.msra.mxu0 0
    %354 = vmatprep.subr.bf16.mxu0 0
    %355 = vmatpush2.bf16.xpose.msra.mxu0 0
    %356 = vmatprep.subr.bf16.mxu0 0
    %357 = vmatpush2.bf16.xpose.msra.mxu0 0
    %358 = vmatprep.subr.bf16.mxu0 0
    %359 = vmatpush2.bf16.xpose.msra.mxu0 0
    %360 = vmatprep.subr.bf16.mxu0 0
    %361 = vmatpush2.bf16.xpose.msra.mxu0 0
    %362 = vmatprep.subr.bf16.mxu0 0
    %363 = vmatpush2.bf16.xpose.msra.mxu0 0
    %364 = vmatprep.subr.bf16.mxu0 0
    %365 = vmatpush2.bf16.xpose.msra.mxu0 0
    %366 = vmatprep.subr.bf16.mxu0 0
    %367 = vmatpush2.bf16.xpose.msra.mxu0 0
    %368 = vmatprep.mubr.bf16.mxu0 0
    %369 = vmatmul.mubr.bf16.gmra.mxu0 %v331
    %v370 = vpop.f32.mrf.mxu0
    %v371 = vadd.f32 %v191, %v370
    %v372 = vpop.f32.mrf.mxu0
    %v373 = vpop.f32.mrf.mxu0
    %v374 = vpop.f32.mrf.mxu0
    %375 = vdwg.mxu0
    %377 = vrot.lane.b32.xlu0 %v323, 96
    %v378 = vpop.permute.xlu0 %377
    %v380 = vsel %vm329, %v321, 0
    %v383 = vsel %vm329, %v378, 0
    %385 = vmatprep.subr.bf16.mxu0 0
    %386 = vmatpush1.bf16.xpose.msra.mxu0 0
    %387 = vmatprep.subr.bf16.mxu0 0
    %388 = vmatpush1.bf16.xpose.msra.mxu0 0
    %389 = vmatprep.subr.bf16.mxu0 0
    %390 = vmatpush1.bf16.xpose.msra.mxu0 0
    %391 = vmatprep.subr.bf16.mxu0 0
    %392 = vmatpush1.bf16.xpose.msra.mxu0 0
    %393 = vmatprep.subr.bf16.mxu0 0
    %394 = vmatpush1.bf16.xpose.msra.mxu0 0
    %395 = vmatprep.subr.bf16.mxu0 0
    %396 = vmatpush1.bf16.xpose.msra.mxu0 0
    %397 = vmatprep.subr.bf16.mxu0 0
    %398 = vmatpush1.bf16.xpose.msra.mxu0 0
    %399 = vmatprep.subr.bf16.mxu0 0
    %400 = vmatpush1.bf16.xpose.msra.mxu0 %v383
    %401 = vmatprep.subr.bf16.mxu0 0
    %402 = vmatpush2.bf16.xpose.msra.mxu0 0
    %403 = vmatprep.subr.bf16.mxu0 0
    %404 = vmatpush2.bf16.xpose.msra.mxu0 0
    %405 = vmatprep.subr.bf16.mxu0 0
    %406 = vmatpush2.bf16.xpose.msra.mxu0 0
    %407 = vmatprep.subr.bf16.mxu0 0
    %408 = vmatpush2.bf16.xpose.msra.mxu0 0
    %409 = vmatprep.subr.bf16.mxu0 0
    %410 = vmatpush2.bf16.xpose.msra.mxu0 0
    %411 = vmatprep.subr.bf16.mxu0 0
    %412 = vmatpush2.bf16.xpose.msra.mxu0 0
    %413 = vmatprep.subr.bf16.mxu0 0
    %414 = vmatpush2.bf16.xpose.msra.mxu0 0
    %415 = vmatprep.subr.bf16.mxu0 0
    %416 = vmatpush2.bf16.xpose.msra.mxu0 0
    %417 = vmatprep.mubr.bf16.mxu0 0
    %418 = vmatmul.mubr.bf16.gmra.mxu0 %v380
    %v419 = vpop.f32.mrf.mxu0
    %v420 = vadd.f32 %v192, %v419
    %v421 = vpop.f32.mrf.mxu0
    %v422 = vpop.f32.mrf.mxu0
    %v423 = vpop.f32.mrf.mxu0
    %424 = vdwg.mxu0
    %v425 = vsel %vm329, %v371, -inf
    %426 = vmax.xlane.f32.xlu0 %v425
    %v427 = vpop.xlane.xlu0 %426
    %v428 = vsel %vm329, %v420, -inf
    %429 = vmax.xlane.f32.xlu0 %v428
    %v430 = vpop.xlane.xlu0 %429
    %v431 = vsub.f32 %v371, %v427
    %v432 = vsub.f32 %v420, %v430
    %v433 = vmul.f32 %v431, 1.442695
    %v434 = vpow.pop %v433
    %v435 = vmul.f32 %v432, 1.442695
    %v436 = vpow.pop %v435
    %v437 = vsel %vm329, %v434, 0.0
    %438 = vadd.xlane.f32.xlu0 %v437
    %v439 = vpop.xlane.xlu0 %438
    %v440 = vsel %vm329, %v436, 0.0
    %441 = vadd.xlane.f32.xlu0 %v440
    %v442 = vpop.xlane.xlu0 %441
    %v443 = vrcp.pop %v439
    %v444 = vrcp.pop %v442
    %v445 = vmul.f32 %v434, %v443
    %v446 = vmul.f32 %v436, %v444
    %v447 = vpack.c.bf16 %v445, %v445
    %v448 = vpack.c.bf16 %v446, %v446
    %450 = vrot.lane.b32.xlu0 %v324, 64
    %v451 = vpop.permute.xlu0 %450
    %v453 = vsel %vm329, %v447, 0
    %vm455 = vcmask 1043456
    %v457 = vsel %vm455, %v451, 0
    %459 = vmatprep.subr.bf16.mxu0 0
    %460 = vmatpush1.bf16.msra.mxu0 0
    %461 = vmatprep.subr.bf16.mxu0 0
    %462 = vmatpush1.bf16.msra.mxu0 0
    %463 = vmatprep.subr.bf16.mxu0 0
    %464 = vmatpush1.bf16.msra.mxu0 0
    %465 = vmatprep.subr.bf16.mxu0 0
    %466 = vmatpush1.bf16.msra.mxu0 0
    %467 = vmatprep.subr.bf16.mxu0 0
    %468 = vmatpush1.bf16.msra.mxu0 0
    %469 = vmatprep.subr.bf16.mxu0 0
    %470 = vmatpush1.bf16.msra.mxu0 0
    %471 = vmatprep.subr.bf16.mxu0 0
    %472 = vmatpush1.bf16.msra.mxu0 0
    %473 = vmatprep.subr.bf16.mxu0 0
    %474 = vmatpush1.bf16.msra.mxu0 %v457
    %475 = vmatprep.subr.bf16.mxu0 0
    %476 = vmatpush2.bf16.msra.mxu0 0
    %477 = vmatprep.subr.bf16.mxu0 0
    %478 = vmatpush2.bf16.msra.mxu0 0
    %479 = vmatprep.subr.bf16.mxu0 0
    %480 = vmatpush2.bf16.msra.mxu0 0
    %481 = vmatprep.subr.bf16.mxu0 0
    %482 = vmatpush2.bf16.msra.mxu0 0
    %483 = vmatprep.subr.bf16.mxu0 0
    %484 = vmatpush2.bf16.msra.mxu0 0
    %485 = vmatprep.subr.bf16.mxu0 0
    %486 = vmatpush2.bf16.msra.mxu0 0
    %487 = vmatprep.subr.bf16.mxu0 0
    %488 = vmatpush2.bf16.msra.mxu0 0
    %489 = vmatprep.subr.bf16.mxu0 0
    %490 = vmatpush2.bf16.msra.mxu0 0
    %491 = vmatprep.mubr.bf16.mxu0 0
    %492 = vmatmul.mubr.bf16.gmra.mxu0 %v453
    %v493 = vpop.f32.mrf.mxu0
    %v494 = vadd.f32 0.0, %v493
    %v495 = vpop.f32.mrf.mxu0
    %v496 = vpop.f32.mrf.mxu0
    %v497 = vpop.f32.mrf.mxu0
    %498 = vdwg.mxu0
    %500 = vrot.lane.b32.xlu0 %v325, 64
    %v501 = vpop.permute.xlu0 %500
    %v503 = vsel %vm329, %v448, 0
    %v506 = vsel %vm455, %v501, 0
    %508 = vmatprep.subr.bf16.mxu0 0
    %509 = vmatpush1.bf16.msra.mxu0 0
    %510 = vmatprep.subr.bf16.mxu0 0
    %511 = vmatpush1.bf16.msra.mxu0 0
    %512 = vmatprep.subr.bf16.mxu0 0
    %513 = vmatpush1.bf16.msra.mxu0 0
    %514 = vmatprep.subr.bf16.mxu0 0
    %515 = vmatpush1.bf16.msra.mxu0 0
    %516 = vmatprep.subr.bf16.mxu0 0
    %517 = vmatpush1.bf16.msra.mxu0 0
    %518 = vmatprep.subr.bf16.mxu0 0
    %519 = vmatpush1.bf16.msra.mxu0 0
    %520 = vmatprep.subr.bf16.mxu0 0
    %521 = vmatpush1.bf16.msra.mxu0 0
    %522 = vmatprep.subr.bf16.mxu0 0
    %523 = vmatpush1.bf16.msra.mxu0 %v506
    %524 = vmatprep.subr.bf16.mxu0 0
    %525 = vmatpush2.bf16.msra.mxu0 0
    %526 = vmatprep.subr.bf16.mxu0 0
    %527 = vmatpush2.bf16.msra.mxu0 0
    %528 = vmatprep.subr.bf16.mxu0 0
    %529 = vmatpush2.bf16.msra.mxu0 0
    %530 = vmatprep.subr.bf16.mxu0 0
    %531 = vmatpush2.bf16.msra.mxu0 0
    %532 = vmatprep.subr.bf16.mxu0 0
    %533 = vmatpush2.bf16.msra.mxu0 0
    %534 = vmatprep.subr.bf16.mxu0 0
    %535 = vmatpush2.bf16.msra.mxu0 0
    %536 = vmatprep.subr.bf16.mxu0 0
    %537 = vmatpush2.bf16.msra.mxu0 0
    %538 = vmatprep.subr.bf16.mxu0 0
    %539 = vmatpush2.bf16.msra.mxu0 0
    %540 = vmatprep.mubr.bf16.mxu0 0
    %541 = vmatmul.mubr.bf16.gmra.mxu0 %v503
    %v542 = vpop.f32.mrf.mxu0
    %v543 = vadd.f32 0.0, %v542
    %v544 = vpop.f32.mrf.mxu0
    %v545 = vpop.f32.mrf.mxu0
    %v546 = vpop.f32.mrf.mxu0
    %547 = vdwg.mxu0
    %549 = vrot.lane.b32.xlu0 %v320, 120
    %v550 = vpop.permute.xlu0 %549
    %551 = vrot.lane.b32.xlu0 %v322, 88
    %v552 = vpop.permute.xlu0 %551
    %v554 = vsel %vm329, %v550, 0
    %v557 = vsel %vm329, %v552, 0
    %559 = vmatprep.subr.bf16.mxu0 0
    %560 = vmatpush1.bf16.xpose.msra.mxu0 0
    %561 = vmatprep.subr.bf16.mxu0 0
    %562 = vmatpush1.bf16.xpose.msra.mxu0 0
    %563 = vmatprep.subr.bf16.mxu0 0
    %564 = vmatpush1.bf16.xpose.msra.mxu0 0
    %565 = vmatprep.subr.bf16.mxu0 0
    %566 = vmatpush1.bf16.xpose.msra.mxu0 0
    %567 = vmatprep.subr.bf16.mxu0 0
    %568 = vmatpush1.bf16.xpose.msra.mxu0 0
    %569 = vmatprep.subr.bf16.mxu0 0
    %570 = vmatpush1.bf16.xpose.msra.mxu0 0
    %571 = vmatprep.subr.bf16.mxu0 0
    %572 = vmatpush1.bf16.xpose.msra.mxu0 0
    %573 = vmatprep.subr.bf16.mxu0 0
    %574 = vmatpush1.bf16.xpose.msra.mxu0 %v557
    %575 = vmatprep.subr.bf16.mxu0 0
    %576 = vmatpush2.bf16.xpose.msra.mxu0 0
    %577 = vmatprep.subr.bf16.mxu0 0
    %578 = vmatpush2.bf16.xpose.msra.mxu0 0
    %579 = vmatprep.subr.bf16.mxu0 0
    %580 = vmatpush2.bf16.xpose.msra.mxu0 0
    %581 = vmatprep.subr.bf16.mxu0 0
    %582 = vmatpush2.bf16.xpose.msra.mxu0 0
    %583 = vmatprep.subr.bf16.mxu0 0
    %584 = vmatpush2.bf16.xpose.msra.mxu0 0
    %585 = vmatprep.subr.bf16.mxu0 0
    %586 = vmatpush2.bf16.xpose.msra.mxu0 0
    %587 = vmatprep.subr.bf16.mxu0 0
    %588 = vmatpush2.bf16.xpose.msra.mxu0 0
    %589 = vmatprep.subr.bf16.mxu0 0
    %590 = vmatpush2.bf16.xpose.msra.mxu0 0
    %591 = vmatprep.mubr.bf16.mxu0 0
    %592 = vmatmul.mubr.bf16.gmra.mxu0 %v554
    %v593 = vpop.f32.mrf.mxu0
    %v594 = vadd.f32 %v191, %v593
    %v595 = vpop.f32.mrf.mxu0
    %v596 = vpop.f32.mrf.mxu0
    %v597 = vpop.f32.mrf.mxu0
    %598 = vdwg.mxu0
    %600 = vrot.lane.b32.xlu0 %v321, 120
    %v601 = vpop.permute.xlu0 %600
    %602 = vrot.lane.b32.xlu0 %v323, 88
    %v603 = vpop.permute.xlu0 %602
    %v605 = vsel %vm329, %v601, 0
    %v608 = vsel %vm329, %v603, 0
    %610 = vmatprep.subr.bf16.mxu0 0
    %611 = vmatpush1.bf16.xpose.msra.mxu0 0
    %612 = vmatprep.subr.bf16.mxu0 0
    %613 = vmatpush1.bf16.xpose.msra.mxu0 0
    %614 = vmatprep.subr.bf16.mxu0 0
    %615 = vmatpush1.bf16.xpose.msra.mxu0 0
    %616 = vmatprep.subr.bf16.mxu0 0
    %617 = vmatpush1.bf16.xpose.msra.mxu0 0
    %618 = vmatprep.subr.bf16.mxu0 0
    %619 = vmatpush1.bf16.xpose.msra.mxu0 0
    %620 = vmatprep.subr.bf16.mxu0 0
    %621 = vmatpush1.bf16.xpose.msra.mxu0 0
    %622 = vmatprep.subr.bf16.mxu0 0
    %623 = vmatpush1.bf16.xpose.msra.mxu0 0
    %624 = vmatprep.subr.bf16.mxu0 0
    %625 = vmatpush1.bf16.xpose.msra.mxu0 %v608
    %626 = vmatprep.subr.bf16.mxu0 0
    %627 = vmatpush2.bf16.xpose.msra.mxu0 0
    %628 = vmatprep.subr.bf16.mxu0 0
    %629 = vmatpush2.bf16.xpose.msra.mxu0 0
    %630 = vmatprep.subr.bf16.mxu0 0
    %631 = vmatpush2.bf16.xpose.msra.mxu0 0
    %632 = vmatprep.subr.bf16.mxu0 0
    %633 = vmatpush2.bf16.xpose.msra.mxu0 0
    %634 = vmatprep.subr.bf16.mxu0 0
    %635 = vmatpush2.bf16.xpose.msra.mxu0 0
    %636 = vmatprep.subr.bf16.mxu0 0
    %637 = vmatpush2.bf16.xpose.msra.mxu0 0
    %638 = vmatprep.subr.bf16.mxu0 0
    %639 = vmatpush2.bf16.xpose.msra.mxu0 0
    %640 = vmatprep.subr.bf16.mxu0 0
    %641 = vmatpush2.bf16.xpose.msra.mxu0 0
    %642 = vmatprep.mubr.bf16.mxu0 0
    %643 = vmatmul.mubr.bf16.gmra.mxu0 %v605
    %v644 = vpop.f32.mrf.mxu0
    %v645 = vadd.f32 %v192, %v644
    %v646 = vpop.f32.mrf.mxu0
    %v647 = vpop.f32.mrf.mxu0
    %v648 = vpop.f32.mrf.mxu0
    %649 = vdwg.mxu0
    %v650 = vsel %vm329, %v594, -inf
    %651 = vmax.xlane.f32.xlu0 %v650
    %v652 = vpop.xlane.xlu0 %651
    %v653 = vsel %vm329, %v645, -inf
    %654 = vmax.xlane.f32.xlu0 %v653
    %v655 = vpop.xlane.xlu0 %654
    %v656 = vsub.f32 %v594, %v652
    %v657 = vsub.f32 %v645, %v655
    %v658 = vmul.f32 %v656, 1.442695
    %v659 = vpow.pop %v658
    %v660 = vmul.f32 %v657, 1.442695
    %v661 = vpow.pop %v660
    %v662 = vsel %vm329, %v659, 0.0
    %663 = vadd.xlane.f32.xlu0 %v662
    %v664 = vpop.xlane.xlu0 %663
    %v665 = vsel %vm329, %v661, 0.0
    %666 = vadd.xlane.f32.xlu0 %v665
    %v667 = vpop.xlane.xlu0 %666
    %v668 = vrcp.pop %v664
    %v669 = vrcp.pop %v667
    %v670 = vmul.f32 %v659, %v668
    %v671 = vmul.f32 %v661, %v669
    %v672 = vpack.c.bf16 %v670, %v670
    %v673 = vpack.c.bf16 %v671, %v671
    %674 = vrot.lane.b32.xlu0 %v324, 56
    %v675 = vpop.permute.xlu0 %674
    %v677 = vsel %vm329, %v672, 0
    %v680 = vsel %vm455, %v675, 0
    %682 = vmatprep.subr.bf16.mxu0 0
    %683 = vmatpush1.bf16.msra.mxu0 0
    %684 = vmatprep.subr.bf16.mxu0 0
    %685 = vmatpush1.bf16.msra.mxu0 0
    %686 = vmatprep.subr.bf16.mxu0 0
    %687 = vmatpush1.bf16.msra.mxu0 0
    %688 = vmatprep.subr.bf16.mxu0 0
    %689 = vmatpush1.bf16.msra.mxu0 0
    %690 = vmatprep.subr.bf16.mxu0 0
    %691 = vmatpush1.bf16.msra.mxu0 0
    %692 = vmatprep.subr.bf16.mxu0 0
    %693 = vmatpush1.bf16.msra.mxu0 0
    %694 = vmatprep.subr.bf16.mxu0 0
    %695 = vmatpush1.bf16.msra.mxu0 0
    %696 = vmatprep.subr.bf16.mxu0 0
    %697 = vmatpush1.bf16.msra.mxu0 %v680
    %698 = vmatprep.subr.bf16.mxu0 0
    %699 = vmatpush2.bf16.msra.mxu0 0
    %700 = vmatprep.subr.bf16.mxu0 0
    %701 = vmatpush2.bf16.msra.mxu0 0
    %702 = vmatprep.subr.bf16.mxu0 0
    %703 = vmatpush2.bf16.msra.mxu0 0
    %704 = vmatprep.subr.bf16.mxu0 0
    %705 = vmatpush2.bf16.msra.mxu0 0
    %706 = vmatprep.subr.bf16.mxu0 0
    %707 = vmatpush2.bf16.msra.mxu0 0
    %708 = vmatprep.subr.bf16.mxu0 0
    %709 = vmatpush2.bf16.msra.mxu0 0
    %710 = vmatprep.subr.bf16.mxu0 0
    %711 = vmatpush2.bf16.msra.mxu0 0
    %712 = vmatprep.subr.bf16.mxu0 0
    %713 = vmatpush2.bf16.msra.mxu0 0
    %714 = vmatprep.mubr.bf16.mxu0 0
    %715 = vmatmul.mubr.bf16.gmra.mxu0 %v677
    %v716 = vpop.f32.mrf.mxu0
    %v717 = vadd.f32 0.0, %v716
    %v718 = vpop.f32.mrf.mxu0
    %v719 = vpop.f32.mrf.mxu0
    %v720 = vpop.f32.mrf.mxu0
    %721 = vdwg.mxu0
    %722 = vrot.lane.b32.xlu0 %v325, 56
    %v723 = vpop.permute.xlu0 %722
    %v725 = vsel %vm329, %v673, 0
    %v728 = vsel %vm455, %v723, 0
    %730 = vmatprep.subr.bf16.mxu0 0
    %731 = vmatpush1.bf16.msra.mxu0 0
    %732 = vmatprep.subr.bf16.mxu0 0
    %733 = vmatpush1.bf16.msra.mxu0 0
    %734 = vmatprep.subr.bf16.mxu0 0
    %735 = vmatpush1.bf16.msra.mxu0 0
    %736 = vmatprep.subr.bf16.mxu0 0
    %737 = vmatpush1.bf16.msra.mxu0 0
    %738 = vmatprep.subr.bf16.mxu0 0
    %739 = vmatpush1.bf16.msra.mxu0 0
    %740 = vmatprep.subr.bf16.mxu0 0
    %741 = vmatpush1.bf16.msra.mxu0 0
    %742 = vmatprep.subr.bf16.mxu0 0
    %743 = vmatpush1.bf16.msra.mxu0 0
    %744 = vmatprep.subr.bf16.mxu0 0
    %745 = vmatpush1.bf16.msra.mxu0 %v728
    %746 = vmatprep.subr.bf16.mxu0 0
    %747 = vmatpush2.bf16.msra.mxu0 0
    %748 = vmatprep.subr.bf16.mxu0 0
    %749 = vmatpush2.bf16.msra.mxu0 0
    %750 = vmatprep.subr.bf16.mxu0 0
    %751 = vmatpush2.bf16.msra.mxu0 0
    %752 = vmatprep.subr.bf16.mxu0 0
    %753 = vmatpush2.bf16.msra.mxu0 0
    %754 = vmatprep.subr.bf16.mxu0 0
    %755 = vmatpush2.bf16.msra.mxu0 0
    %756 = vmatprep.subr.bf16.mxu0 0
    %757 = vmatpush2.bf16.msra.mxu0 0
    %758 = vmatprep.subr.bf16.mxu0 0
    %759 = vmatpush2.bf16.msra.mxu0 0
    %760 = vmatprep.subr.bf16.mxu0 0
    %761 = vmatpush2.bf16.msra.mxu0 0
    %762 = vmatprep.mubr.bf16.mxu0 0
    %763 = vmatmul.mubr.bf16.gmra.mxu0 %v725
    %v764 = vpop.f32.mrf.mxu0
    %v765 = vadd.f32 0.0, %v764
    %v766 = vpop.f32.mrf.mxu0
    %v767 = vpop.f32.mrf.mxu0
    %v768 = vpop.f32.mrf.mxu0
    %769 = vdwg.mxu0
    %770 = vrot.lane.b32.xlu0 %v320, 112
    %v771 = vpop.permute.xlu0 %770
    %772 = vrot.lane.b32.xlu0 %v322, 80
    %v773 = vpop.permute.xlu0 %772
    %v775 = vsel %vm329, %v771, 0
    %v778 = vsel %vm329, %v773, 0
    %780 = vmatprep.subr.bf16.mxu0 0
    %781 = vmatpush1.bf16.xpose.msra.mxu0 0
    %782 = vmatprep.subr.bf16.mxu0 0
    %783 = vmatpush1.bf16.xpose.msra.mxu0 0
    %784 = vmatprep.subr.bf16.mxu0 0
    %785 = vmatpush1.bf16.xpose.msra.mxu0 0
    %786 = vmatprep.subr.bf16.mxu0 0
    %787 = vmatpush1.bf16.xpose.msra.mxu0 0
    %788 = vmatprep.subr.bf16.mxu0 0
    %789 = vmatpush1.bf16.xpose.msra.mxu0 0
    %790 = vmatprep.subr.bf16.mxu0 0
    %791 = vmatpush1.bf16.xpose.msra.mxu0 0
    %792 = vmatprep.subr.bf16.mxu0 0
    %793 = vmatpush1.bf16.xpose.msra.mxu0 0
    %794 = vmatprep.subr.bf16.mxu0 0
    %795 = vmatpush1.bf16.xpose.msra.mxu0 %v778
    %796 = vmatprep.subr.bf16.mxu0 0
    %797 = vmatpush2.bf16.xpose.msra.mxu0 0
    %798 = vmatprep.subr.bf16.mxu0 0
    %799 = vmatpush2.bf16.xpose.msra.mxu0 0
    %800 = vmatprep.subr.bf16.mxu0 0
    %801 = vmatpush2.bf16.xpose.msra.mxu0 0
    %802 = vmatprep.subr.bf16.mxu0 0
    %803 = vmatpush2.bf16.xpose.msra.mxu0 0
    %804 = vmatprep.subr.bf16.mxu0 0
    %805 = vmatpush2.bf16.xpose.msra.mxu0 0
    %806 = vmatprep.subr.bf16.mxu0 0
    %807 = vmatpush2.bf16.xpose.msra.mxu0 0
    %808 = vmatprep.subr.bf16.mxu0 0
    %809 = vmatpush2.bf16.xpose.msra.mxu0 0
    %810 = vmatprep.subr.bf16.mxu0 0
    %811 = vmatpush2.bf16.xpose.msra.mxu0 0
    %812 = vmatprep.mubr.bf16.mxu0 0
    %813 = vmatmul.mubr.bf16.gmra.mxu0 %v775
    %v814 = vpop.f32.mrf.mxu0
    %v815 = vadd.f32 %v191, %v814
    %v816 = vpop.f32.mrf.mxu0
    %v817 = vpop.f32.mrf.mxu0
    %v818 = vpop.f32.mrf.mxu0
    %819 = vdwg.mxu0
    %820 = vrot.lane.b32.xlu0 %v321, 112
    %v821 = vpop.permute.xlu0 %820
    %822 = vrot.lane.b32.xlu0 %v323, 80
    %v823 = vpop.permute.xlu0 %822
    %v825 = vsel %vm329, %v821, 0
    %v828 = vsel %vm329, %v823, 0
    %830 = vmatprep.subr.bf16.mxu0 0
    %831 = vmatpush1.bf16.xpose.msra.mxu0 0
    %832 = vmatprep.subr.bf16.mxu0 0
    %833 = vmatpush1.bf16.xpose.msra.mxu0 0
    %834 = vmatprep.subr.bf16.mxu0 0
    %835 = vmatpush1.bf16.xpose.msra.mxu0 0
    %836 = vmatprep.subr.bf16.mxu0 0
    %837 = vmatpush1.bf16.xpose.msra.mxu0 0
    %838 = vmatprep.subr.bf16.mxu0 0
    %839 = vmatpush1.bf16.xpose.msra.mxu0 0
    %840 = vmatprep.subr.bf16.mxu0 0
    %841 = vmatpush1.bf16.xpose.msra.mxu0 0
    %842 = vmatprep.subr.bf16.mxu0 0
    %843 = vmatpush1.bf16.xpose.msra.mxu0 0
    %844 = vmatprep.subr.bf16.mxu0 0
    %845 = vmatpush1.bf16.xpose.msra.mxu0 %v828
    %846 = vmatprep.subr.bf16.mxu0 0
    %847 = vmatpush2.bf16.xpose.msra.mxu0 0
    %848 = vmatprep.subr.bf16.mxu0 0
    %849 = vmatpush2.bf16.xpose.msra.mxu0 0
    %850 = vmatprep.subr.bf16.mxu0 0
    %851 = vmatpush2.bf16.xpose.msra.mxu0 0
    %852 = vmatprep.subr.bf16.mxu0 0
    %853 = vmatpush2.bf16.xpose.msra.mxu0 0
    %854 = vmatprep.subr.bf16.mxu0 0
    %855 = vmatpush2.bf16.xpose.msra.mxu0 0
    %856 = vmatprep.subr.bf16.mxu0 0
    %857 = vmatpush2.bf16.xpose.msra.mxu0 0
    %858 = vmatprep.subr.bf16.mxu0 0
    %859 = vmatpush2.bf16.xpose.msra.mxu0 0
    %860 = vmatprep.subr.bf16.mxu0 0
    %861 = vmatpush2.bf16.xpose.msra.mxu0 0
    %862 = vmatprep.mubr.bf16.mxu0 0
    %863 = vmatmul.mubr.bf16.gmra.mxu0 %v825
    %v864 = vpop.f32.mrf.mxu0
    %v865 = vadd.f32 %v192, %v864
    %v866 = vpop.f32.mrf.mxu0
    %v867 = vpop.f32.mrf.mxu0
    %v868 = vpop.f32.mrf.mxu0
    %869 = vdwg.mxu0
    %v870 = vsel %vm329, %v815, -inf
    %871 = vmax.xlane.f32.xlu0 %v870
    %v872 = vpop.xlane.xlu0 %871
    %v873 = vsel %vm329, %v865, -inf
    %874 = vmax.xlane.f32.xlu0 %v873
    %v875 = vpop.xlane.xlu0 %874
    %v876 = vsub.f32 %v815, %v872
    %v877 = vsub.f32 %v865, %v875
    %v878 = vmul.f32 %v876, 1.442695
    %v879 = vpow.pop %v878
    %v880 = vmul.f32 %v877, 1.442695
    %v881 = vpow.pop %v880
    %v882 = vsel %vm329, %v879, 0.0
    %883 = vadd.xlane.f32.xlu0 %v882
    %v884 = vpop.xlane.xlu0 %883
    %v885 = vsel %vm329, %v881, 0.0
    %886 = vadd.xlane.f32.xlu0 %v885
    %v887 = vpop.xlane.xlu0 %886
    %v888 = vrcp.pop %v884
    %v889 = vrcp.pop %v887
    %v890 = vmul.f32 %v879, %v888
    %v891 = vmul.f32 %v881, %v889
    %v892 = vpack.c.bf16 %v890, %v890
    %v893 = vpack.c.bf16 %v891, %v891
    %894 = vrot.lane.b32.xlu0 %v324, 48
    %v895 = vpop.permute.xlu0 %894
    %v897 = vsel %vm329, %v892, 0
    %v900 = vsel %vm455, %v895, 0
    %902 = vmatprep.subr.bf16.mxu0 0
    %903 = vmatpush1.bf16.msra.mxu0 0
    %904 = vmatprep.subr.bf16.mxu0 0
    %905 = vmatpush1.bf16.msra.mxu0 0
    %906 = vmatprep.subr.bf16.mxu0 0
    %907 = vmatpush1.bf16.msra.mxu0 0
    %908 = vmatprep.subr.bf16.mxu0 0
    %909 = vmatpush1.bf16.msra.mxu0 0
    %910 = vmatprep.subr.bf16.mxu0 0
    %911 = vmatpush1.bf16.msra.mxu0 0
    %912 = vmatprep.subr.bf16.mxu0 0
    %913 = vmatpush1.bf16.msra.mxu0 0
    %914 = vmatprep.subr.bf16.mxu0 0
    %915 = vmatpush1.bf16.msra.mxu0 0
    %916 = vmatprep.subr.bf16.mxu0 0
    %917 = vmatpush1.bf16.msra.mxu0 %v900
    %918 = vmatprep.subr.bf16.mxu0 0
    %919 = vmatpush2.bf16.msra.mxu0 0
    %920 = vmatprep.subr.bf16.mxu0 0
    %921 = vmatpush2.bf16.msra.mxu0 0
    %922 = vmatprep.subr.bf16.mxu0 0
    %923 = vmatpush2.bf16.msra.mxu0 0
    %924 = vmatprep.subr.bf16.mxu0 0
    %925 = vmatpush2.bf16.msra.mxu0 0
    %926 = vmatprep.subr.bf16.mxu0 0
    %927 = vmatpush2.bf16.msra.mxu0 0
    %928 = vmatprep.subr.bf16.mxu0 0
    %929 = vmatpush2.bf16.msra.mxu0 0
    %930 = vmatprep.subr.bf16.mxu0 0
    %931 = vmatpush2.bf16.msra.mxu0 0
    %932 = vmatprep.subr.bf16.mxu0 0
    %933 = vmatpush2.bf16.msra.mxu0 0
    %934 = vmatprep.mubr.bf16.mxu0 0
    %935 = vmatmul.mubr.bf16.gmra.mxu0 %v897
    %v936 = vpop.f32.mrf.mxu0
    %v937 = vadd.f32 0.0, %v936
    %v938 = vpop.f32.mrf.mxu0
    %v939 = vpop.f32.mrf.mxu0
    %v940 = vpop.f32.mrf.mxu0
    %941 = vdwg.mxu0
    %942 = vrot.lane.b32.xlu0 %v325, 48
    %v943 = vpop.permute.xlu0 %942
    %v945 = vsel %vm329, %v893, 0
    %v948 = vsel %vm455, %v943, 0
    %950 = vmatprep.subr.bf16.mxu0 0
    %951 = vmatpush1.bf16.msra.mxu0 0
    %952 = vmatprep.subr.bf16.mxu0 0
    %953 = vmatpush1.bf16.msra.mxu0 0
    %954 = vmatprep.subr.bf16.mxu0 0
    %955 = vmatpush1.bf16.msra.mxu0 0
    %956 = vmatprep.subr.bf16.mxu0 0
    %957 = vmatpush1.bf16.msra.mxu0 0
    %958 = vmatprep.subr.bf16.mxu0 0
    %959 = vmatpush1.bf16.msra.mxu0 0
    %960 = vmatprep.subr.bf16.mxu0 0
    %961 = vmatpush1.bf16.msra.mxu0 0
    %962 = vmatprep.subr.bf16.mxu0 0
    %963 = vmatpush1.bf16.msra.mxu0 0
    %964 = vmatprep.subr.bf16.mxu0 0
    %965 = vmatpush1.bf16.msra.mxu0 %v948
    %966 = vmatprep.subr.bf16.mxu0 0
    %967 = vmatpush2.bf16.msra.mxu0 0
    %968 = vmatprep.subr.bf16.mxu0 0
    %969 = vmatpush2.bf16.msra.mxu0 0
    %970 = vmatprep.subr.bf16.mxu0 0
    %971 = vmatpush2.bf16.msra.mxu0 0
    %972 = vmatprep.subr.bf16.mxu0 0
    %973 = vmatpush2.bf16.msra.mxu0 0
    %974 = vmatprep.subr.bf16.mxu0 0
    %975 = vmatpush2.bf16.msra.mxu0 0
    %976 = vmatprep.subr.bf16.mxu0 0
    %977 = vmatpush2.bf16.msra.mxu0 0
    %978 = vmatprep.subr.bf16.mxu0 0
    %979 = vmatpush2.bf16.msra.mxu0 0
    %980 = vmatprep.subr.bf16.mxu0 0
    %981 = vmatpush2.bf16.msra.mxu0 0
    %982 = vmatprep.mubr.bf16.mxu0 0
    %983 = vmatmul.mubr.bf16.gmra.mxu0 %v945
    %v984 = vpop.f32.mrf.mxu0
    %v985 = vadd.f32 0.0, %v984
    %v986 = vpop.f32.mrf.mxu0
    %v987 = vpop.f32.mrf.mxu0
    %v988 = vpop.f32.mrf.mxu0
    %989 = vdwg.mxu0
    %990 = vrot.lane.b32.xlu0 %v320, 104
    %v991 = vpop.permute.xlu0 %990
    %992 = vrot.lane.b32.xlu0 %v322, 72
    %v993 = vpop.permute.xlu0 %992
    %v995 = vsel %vm329, %v991, 0
    %v998 = vsel %vm329, %v993, 0
    %1000 = vmatprep.subr.bf16.mxu0 0
    %1001 = vmatpush1.bf16.xpose.msra.mxu0 0
    %1002 = vmatprep.subr.bf16.mxu0 0
    %1003 = vmatpush1.bf16.xpose.msra.mxu0 0
    %1004 = vmatprep.subr.bf16.mxu0 0
    %1005 = vmatpush1.bf16.xpose.msra.mxu0 0
    %1006 = vmatprep.subr.bf16.mxu0 0
    %1007 = vmatpush1.bf16.xpose.msra.mxu0 0
    %1008 = vmatprep.subr.bf16.mxu0 0
    %1009 = vmatpush1.bf16.xpose.msra.mxu0 0
    %1010 = vmatprep.subr.bf16.mxu0 0
    %1011 = vmatpush1.bf16.xpose.msra.mxu0 0
    %1012 = vmatprep.subr.bf16.mxu0 0
    %1013 = vmatpush1.bf16.xpose.msra.mxu0 0
    %1014 = vmatprep.subr.bf16.mxu0 0
    %1015 = vmatpush1.bf16.xpose.msra.mxu0 %v998
    %1016 = vmatprep.subr.bf16.mxu0 0
    %1017 = vmatpush2.bf16.xpose.msra.mxu0 0
    %1018 = vmatprep.subr.bf16.mxu0 0
    %1019 = vmatpush2.bf16.xpose.msra.mxu0 0
    %1020 = vmatprep.subr.bf16.mxu0 0
    %1021 = vmatpush2.bf16.xpose.msra.mxu0 0
    %1022 = vmatprep.subr.bf16.mxu0 0
    %1023 = vmatpush2.bf16.xpose.msra.mxu0 0
    %1024 = vmatprep.subr.bf16.mxu0 0
    %1025 = vmatpush2.bf16.xpose.msra.mxu0 0
    %1026 = vmatprep.subr.bf16.mxu0 0
    %1027 = vmatpush2.bf16.xpose.msra.mxu0 0
    %1028 = vmatprep.subr.bf16.mxu0 0
    %1029 = vmatpush2.bf16.xpose.msra.mxu0 0
    %1030 = vmatprep.subr.bf16.mxu0 0
    %1031 = vmatpush2.bf16.xpose.msra.mxu0 0
    %1032 = vmatprep.mubr.bf16.mxu0 0
    %1033 = vmatmul.mubr.bf16.gmra.mxu0 %v995
    %v1034 = vpop.f32.mrf.mxu0
    %v1035 = vadd.f32 %v191, %v1034
    %v1036 = vpop.f32.mrf.mxu0
    %v1037 = vpop.f32.mrf.mxu0
    %v1038 = vpop.f32.mrf.mxu0
    %1039 = vdwg.mxu0
    %1040 = vrot.lane.b32.xlu0 %v321, 104
    %v1041 = vpop.permute.xlu0 %1040
    %1042 = vrot.lane.b32.xlu0 %v323, 72
    %v1043 = vpop.permute.xlu0 %1042
    %v1045 = vsel %vm329, %v1041, 0
    %v1048 = vsel %vm329, %v1043, 0
    %1050 = vmatprep.subr.bf16.mxu0 0
    %1051 = vmatpush1.bf16.xpose.msra.mxu0 0
    %1052 = vmatprep.subr.bf16.mxu0 0
    %1053 = vmatpush1.bf16.xpose.msra.mxu0 0
    %1054 = vmatprep.subr.bf16.mxu0 0
    %1055 = vmatpush1.bf16.xpose.msra.mxu0 0
    %1056 = vmatprep.subr.bf16.mxu0 0
    %1057 = vmatpush1.bf16.xpose.msra.mxu0 0
    %1058 = vmatprep.subr.bf16.mxu0 0
    %1059 = vmatpush1.bf16.xpose.msra.mxu0 0
    %1060 = vmatprep.subr.bf16.mxu0 0
    %1061 = vmatpush1.bf16.xpose.msra.mxu0 0
    %1062 = vmatprep.subr.bf16.mxu0 0
    %1063 = vmatpush1.bf16.xpose.msra.mxu0 0
    %1064 = vmatprep.subr.bf16.mxu0 0
    %1065 = vmatpush1.bf16.xpose.msra.mxu0 %v1048
    %1066 = vmatprep.subr.bf16.mxu0 0
    %1067 = vmatpush2.bf16.xpose.msra.mxu0 0
    %1068 = vmatprep.subr.bf16.mxu0 0
    %1069 = vmatpush2.bf16.xpose.msra.mxu0 0
    %1070 = vmatprep.subr.bf16.mxu0 0
    %1071 = vmatpush2.bf16.xpose.msra.mxu0 0
    %1072 = vmatprep.subr.bf16.mxu0 0
    %1073 = vmatpush2.bf16.xpose.msra.mxu0 0
    %1074 = vmatprep.subr.bf16.mxu0 0
    %1075 = vmatpush2.bf16.xpose.msra.mxu0 0
    %1076 = vmatprep.subr.bf16.mxu0 0
    %1077 = vmatpush2.bf16.xpose.msra.mxu0 0
    %1078 = vmatprep.subr.bf16.mxu0 0
    %1079 = vmatpush2.bf16.xpose.msra.mxu0 0
    %1080 = vmatprep.subr.bf16.mxu0 0
    %1081 = vmatpush2.bf16.xpose.msra.mxu0 0
    %1082 = vmatprep.mubr.bf16.mxu0 0
    %1083 = vmatmul.mubr.bf16.gmra.mxu0 %v1045
    %v1084 = vpop.f32.mrf.mxu0
    %v1085 = vadd.f32 %v192, %v1084
    %v1086 = vpop.f32.mrf.mxu0
    %v1087 = vpop.f32.mrf.mxu0
    %v1088 = vpop.f32.mrf.mxu0
    %1089 = vdwg.mxu0
    %v1090 = vsel %vm329, %v1035, -inf
    %1091 = vmax.xlane.f32.xlu0 %v1090
    %v1092 = vpop.xlane.xlu0 %1091
    %v1093 = vsel %vm329, %v1085, -inf
    %1094 = vmax.xlane.f32.xlu0 %v1093
    %v1095 = vpop.xlane.xlu0 %1094
    %v1096 = vsub.f32 %v1035, %v1092
    %v1097 = vsub.f32 %v1085, %v1095
    %v1098 = vmul.f32 %v1096, 1.442695
    %v1099 = vpow.pop %v1098
    %v1100 = vmul.f32 %v1097, 1.442695
    %v1101 = vpow.pop %v1100
    %v1102 = vsel %vm329, %v1099, 0.0
    %1103 = vadd.xlane.f32.xlu0 %v1102
    %v1104 = vpop.xlane.xlu0 %1103
    %v1105 = vsel %vm329, %v1101, 0.0
    %1106 = vadd.xlane.f32.xlu0 %v1105
    %v1107 = vpop.xlane.xlu0 %1106
    %v1108 = vrcp.pop %v1104
    %v1109 = vrcp.pop %v1107
    %v1110 = vmul.f32 %v1099, %v1108
    %v1111 = vmul.f32 %v1101, %v1109
    %v1112 = vpack.c.bf16 %v1110, %v1110
    %v1113 = vpack.c.bf16 %v1111, %v1111
    %1114 = vrot.lane.b32.xlu0 %v324, 40
    %v1115 = vpop.permute.xlu0 %1114
    %v1117 = vsel %vm329, %v1112, 0
    %v1120 = vsel %vm455, %v1115, 0
    %1122 = vmatprep.subr.bf16.mxu0 0
    %1123 = vmatpush1.bf16.msra.mxu0 0
    %1124 = vmatprep.subr.bf16.mxu0 0
    %1125 = vmatpush1.bf16.msra.mxu0 0
    %1126 = vmatprep.subr.bf16.mxu0 0
    %1127 = vmatpush1.bf16.msra.mxu0 0
    %1128 = vmatprep.subr.bf16.mxu0 0
    %1129 = vmatpush1.bf16.msra.mxu0 0
    %1130 = vmatprep.subr.bf16.mxu0 0
    %1131 = vmatpush1.bf16.msra.mxu0 0
    %1132 = vmatprep.subr.bf16.mxu0 0
    %1133 = vmatpush1.bf16.msra.mxu0 0
    %1134 = vmatprep.subr.bf16.mxu0 0
    %1135 = vmatpush1.bf16.msra.mxu0 0
    %1136 = vmatprep.subr.bf16.mxu0 0
    %1137 = vmatpush1.bf16.msra.mxu0 %v1120
    %1138 = vmatprep.subr.bf16.mxu0 0
    %1139 = vmatpush2.bf16.msra.mxu0 0
    %1140 = vmatprep.subr.bf16.mxu0 0
    %1141 = vmatpush2.bf16.msra.mxu0 0
    %1142 = vmatprep.subr.bf16.mxu0 0
    %1143 = vmatpush2.bf16.msra.mxu0 0
    %1144 = vmatprep.subr.bf16.mxu0 0
    %1145 = vmatpush2.bf16.msra.mxu0 0
    %1146 = vmatprep.subr.bf16.mxu0 0
    %1147 = vmatpush2.bf16.msra.mxu0 0
    %1148 = vmatprep.subr.bf16.mxu0 0
    %1149 = vmatpush2.bf16.msra.mxu0 0
    %1150 = vmatprep.subr.bf16.mxu0 0
    %1151 = vmatpush2.bf16.msra.mxu0 0
    %1152 = vmatprep.subr.bf16.mxu0 0
    %1153 = vmatpush2.bf16.msra.mxu0 0
    %1154 = vmatprep.mubr.bf16.mxu0 0
    %1155 = vmatmul.mubr.bf16.gmra.mxu0 %v1117
    %v1156 = vpop.f32.mrf.mxu0
    %v1157 = vadd.f32 0.0, %v1156
    %v1158 = vpop.f32.mrf.mxu0
    %v1159 = vpop.f32.mrf.mxu0
    %v1160 = vpop.f32.mrf.mxu0
    %1161 = vdwg.mxu0
    %1162 = vrot.lane.b32.xlu0 %v325, 40
    %v1163 = vpop.permute.xlu0 %1162
    %v1165 = vsel %vm329, %v1113, 0
    %v1168 = vsel %vm455, %v1163, 0
    %1170 = vmatprep.subr.bf16.mxu0 0
    %1171 = vmatpush1.bf16.msra.mxu0 0
    %1172 = vmatprep.subr.bf16.mxu0 0
    %1173 = vmatpush1.bf16.msra.mxu0 0
    %1174 = vmatprep.subr.bf16.mxu0 0
    %1175 = vmatpush1.bf16.msra.mxu0 0
    %1176 = vmatprep.subr.bf16.mxu0 0
    %1177 = vmatpush1.bf16.msra.mxu0 0
    %1178 = vmatprep.subr.bf16.mxu0 0
    %1179 = vmatpush1.bf16.msra.mxu0 0
    %1180 = vmatprep.subr.bf16.mxu0 0
    %1181 = vmatpush1.bf16.msra.mxu0 0
    %1182 = vmatprep.subr.bf16.mxu0 0
    %1183 = vmatpush1.bf16.msra.mxu0 0
    %1184 = vmatprep.subr.bf16.mxu0 0
    %1185 = vmatpush1.bf16.msra.mxu0 %v1168
    %1186 = vmatprep.subr.bf16.mxu0 0
    %1187 = vmatpush2.bf16.msra.mxu0 0
    %1188 = vmatprep.subr.bf16.mxu0 0
    %1189 = vmatpush2.bf16.msra.mxu0 0
    %1190 = vmatprep.subr.bf16.mxu0 0
    %1191 = vmatpush2.bf16.msra.mxu0 0
    %1192 = vmatprep.subr.bf16.mxu0 0
    %1193 = vmatpush2.bf16.msra.mxu0 0
    %1194 = vmatprep.subr.bf16.mxu0 0
    %1195 = vmatpush2.bf16.msra.mxu0 0
    %1196 = vmatprep.subr.bf16.mxu0 0
    %1197 = vmatpush2.bf16.msra.mxu0 0
    %1198 = vmatprep.subr.bf16.mxu0 0
    %1199 = vmatpush2.bf16.msra.mxu0 0
    %1200 = vmatprep.subr.bf16.mxu0 0
    %1201 = vmatpush2.bf16.msra.mxu0 0
    %1202 = vmatprep.mubr.bf16.mxu0 0
    %1203 = vmatmul.mubr.bf16.gmra.mxu0 %v1165
    %v1204 = vpop.f32.mrf.mxu0
    %v1205 = vadd.f32 0.0, %v1204
    %v1206 = vpop.f32.mrf.mxu0
    %v1207 = vpop.f32.mrf.mxu0
    %v1208 = vpop.f32.mrf.mxu0
    %1209 = vdwg.mxu0
    %1212 = vrot.lane.b32.xlu0 %v717, 8
    %v1213 = vpop.permute.xlu0 %1212
    %1214 = vrot.lane.b32.xlu0 %v765, 8
    %v1215 = vpop.permute.xlu0 %1214
    %1220 = vrot.lane.b32.xlu0 %v937, 16
    %v1221 = vpop.permute.xlu0 %1220
    %1222 = vrot.lane.b32.xlu0 %v985, 16
    %v1223 = vpop.permute.xlu0 %1222
    %1228 = vrot.lane.b32.xlu0 %v1157, 24
    %v1229 = vpop.permute.xlu0 %1228
    %1230 = vrot.lane.b32.xlu0 %v1205, 24
    %v1231 = vpop.permute.xlu0 %1230
    %v1234 = vsel %vm329, %v494, %v1213
    %v1235 = vsel %vm329, %v543, %v1215
    %vm1236 = vcmask 130048
    %v1237 = vsel %vm1236, %v1234, %v1221
    %v1238 = vsel %vm1236, %v1235, %v1223
    %vm1239 = vcmask 195584
    %v1240 = vsel %vm1239, %v1237, %v1229
    %v1241 = vsel %vm1239, %v1238, %v1231
    %v1242 = vpack.c.bf16 %v1241, %v1240
    %v1243 = vld [vmem:[%s6] sm:$0xf]
    %v1244 = vld [vmem:[%s6 + $0x4] sm:$0xf]
    %v1245 = vld [vmem:[%s6 + $0x8] sm:$0xf]
    %v1246 = vld [vmem:[%s6 + $0xc] sm:$0xf]
    %v1251 = vunpack.c.l.b16 %v1243
    %v1252 = vunpack.c.l.b16 %v1244
    %v1253 = vunpack.c.l.b16 %v1245
    %v1254 = vunpack.c.l.b16 %v1246
    %v1255 = vpack.c.b16 %v1252, %v1251
    %v1256 = vpack.c.b16 %v1254, %v1253
    %v1260 = vsel %vm193, %v1242, 0
    %1262 = vmatprep.subr.bf16.mxu0 0
    %1263 = vmatpush1.bf16.msra.mxu0 0
    %1264 = vmatprep.subr.bf16.mxu0 0
    %1265 = vmatpush1.bf16.msra.mxu0 0
    %1266 = vmatprep.subr.bf16.mxu0 0
    %1267 = vmatpush1.bf16.msra.mxu0 0
    %1268 = vmatprep.subr.bf16.mxu0 0
    %1269 = vmatpush1.bf16.msra.mxu0 0
    %1270 = vmatprep.subr.bf16.mxu0 0
    %1271 = vmatpush1.bf16.msra.mxu0 0
    %1272 = vmatprep.subr.bf16.mxu0 0
    %1273 = vmatpush1.bf16.msra.mxu0 0
    %1274 = vmatprep.subr.bf16.mxu0 0
    %1275 = vmatpush1.bf16.msra.mxu0 %v1256
    %1276 = vmatprep.subr.bf16.mxu0 0
    %1277 = vmatpush1.bf16.msra.mxu0 %v1255
    %1278 = vmatprep.subr.bf16.mxu0 0
    %1279 = vmatpush2.bf16.msra.mxu0 0
    %1280 = vmatprep.subr.bf16.mxu0 0
    %1281 = vmatpush2.bf16.msra.mxu0 0
    %1282 = vmatprep.subr.bf16.mxu0 0
    %1283 = vmatpush2.bf16.msra.mxu0 0
    %1284 = vmatprep.subr.bf16.mxu0 0
    %1285 = vmatpush2.bf16.msra.mxu0 0
    %1286 = vmatprep.subr.bf16.mxu0 0
    %1287 = vmatpush2.bf16.msra.mxu0 0
    %1288 = vmatprep.subr.bf16.mxu0 0
    %1289 = vmatpush2.bf16.msra.mxu0 0
    %1290 = vmatprep.subr.bf16.mxu0 0
    %1291 = vmatpush2.bf16.msra.mxu0 0
    %1292 = vmatprep.subr.bf16.mxu0 0
    %1293 = vmatpush2.bf16.msra.mxu0 0
    %1294 = vmatprep.mubr.bf16.mxu0 0
    %1295 = vmatmul.mubr.bf16.gmra.mxu0 %v1260
    %v1296 = vpop.f32.mrf.mxu0
    %v1297 = vadd.f32 0.0, %v1296
    %v1298 = vpop.f32.mrf.mxu0
    %v1299 = vpop.f32.mrf.mxu0
    %v1300 = vadd.f32 0.0, %v1299
    %v1301 = vpop.f32.mrf.mxu0
    %1302 = vdwg.mxu0
    %v1303 = vadd.f32 %v137, %v1297
    %v1304 = vadd.f32 %v142, %v1300
    %v1305 = vlaneseq
    %v1306 = vshrl.u32 %v1305, 7
    %v1307 = vsub.s32 5, %v1306
    %v1308 = vrot.slane %v37, %v1307
    %v1309 = vadd.f32 %v1303, %v1308
    %v1310 = vadd.f32 %v1304, %v1308
    %v1311 = vsel %vm193, %v1309, 0.0
    %1312 = vadd.xlane.f32.xlu0 %v1311
    %v1313 = vpop.xlane.xlu0 %1312
    %v1314 = vsel %vm193, %v1310, 0.0
    %1315 = vadd.xlane.f32.xlu0 %v1314
    %v1316 = vpop.xlane.xlu0 %1315
    %v1317 = vmul.f32 %v1313, %v200
    %v1318 = vmul.f32 %v1316, %v200
    %v1319 = vsub.f32 %v1309, %v1317
    %v1320 = vsub.f32 %v1310, %v1318
    %v1321 = vmul.f32 %v1319, %v1319
    %v1322 = vmul.f32 %v1320, %v1320
    %v1323 = vsel %vm193, %v1321, 0.0
    %1324 = vadd.xlane.f32.xlu0 %v1323
    %v1325 = vpop.xlane.xlu0 %1324
    %v1326 = vsel %vm193, %v1322, 0.0
    %1327 = vadd.xlane.f32.xlu0 %v1326
    %v1328 = vpop.xlane.xlu0 %1327
    %v1329 = vmul.f32 %v1325, %v200
    %v1330 = vmul.f32 %v1328, %v200
    %v1331 = vadd.f32 %v1329, 1e-05
    %v1332 = vadd.f32 %v1330, 1e-05
    %v1333 = vrsqrt.pop %v1331
    %v1334 = vrsqrt.pop %v1332
    %v1335 = vmul.f32 %v1319, %v1333
    %v1336 = vmul.f32 %v1320, %v1334
    %v1337 = vlaneseq
    %v1338 = vshrl.u32 %v1337, 7
    %v1339 = vsub.s32 6, %v1338
    %v1340 = vrot.slane %v37, %v1339
    %v1341 = vmul.f32 %v1335, %v1340
    %v1342 = vmul.f32 %v1336, %v1340
    %v1343 = vlaneseq
    %v1344 = vshrl.u32 %v1343, 7
    %v1345 = vsub.s32 7, %v1344
    %v1346 = vrot.slane %v37, %v1345
    %v1347 = vadd.f32 %v1341, %v1346
    %v1348 = vadd.f32 %v1342, %v1346
    %v1349 = vpack.c.bf16 %v1348, %v1347
    %v1350 = vld [vmem:[%s7] sm:$0xf]
    %v1351 = vld [vmem:[%s7 + $0x4] sm:$0xf]
    %v1352 = vld [vmem:[%s7 + $0x8] sm:$0xf]
    %v1353 = vld [vmem:[%s7 + $0xc] sm:$0xf]
    %v1354 = vld [vmem:[%s4] sm:$0x1]
    %v1356 = vlaneseq
    %v1357 = vshrl.u32 %v1356, 7
    %v1358 = vsub.s32 0, %v1357
    %v1359 = vrot.slane %v1354, %v1358
    %v1365 = vunpack.c.l.b16 %v1350
    %v1366 = vunpack.c.l.b16 %v1351
    %v1367 = vunpack.c.l.b16 %v1352
    %v1368 = vunpack.c.l.b16 %v1353
    %v1369 = vpack.c.b16 %v1366, %v1365
    %v1370 = vpack.c.b16 %v1368, %v1367
    %v1374 = vsel %vm193, %v1349, 0
    %1376 = vmatprep.subr.bf16.mxu0 0
    %1377 = vmatpush1.bf16.msra.mxu0 0
    %1378 = vmatprep.subr.bf16.mxu0 0
    %1379 = vmatpush1.bf16.msra.mxu0 0
    %1380 = vmatprep.subr.bf16.mxu0 0
    %1381 = vmatpush1.bf16.msra.mxu0 0
    %1382 = vmatprep.subr.bf16.mxu0 0
    %1383 = vmatpush1.bf16.msra.mxu0 0
    %1384 = vmatprep.subr.bf16.mxu0 0
    %1385 = vmatpush1.bf16.msra.mxu0 0
    %1386 = vmatprep.subr.bf16.mxu0 0
    %1387 = vmatpush1.bf16.msra.mxu0 0
    %1388 = vmatprep.subr.bf16.mxu0 0
    %1389 = vmatpush1.bf16.msra.mxu0 %v1370
    %1390 = vmatprep.subr.bf16.mxu0 0
    %1391 = vmatpush1.bf16.msra.mxu0 %v1369
    %1392 = vmatprep.subr.bf16.mxu0 0
    %1393 = vmatpush2.bf16.msra.mxu0 0
    %1394 = vmatprep.subr.bf16.mxu0 0
    %1395 = vmatpush2.bf16.msra.mxu0 0
    %1396 = vmatprep.subr.bf16.mxu0 0
    %1397 = vmatpush2.bf16.msra.mxu0 0
    %1398 = vmatprep.subr.bf16.mxu0 0
    %1399 = vmatpush2.bf16.msra.mxu0 0
    %1400 = vmatprep.subr.bf16.mxu0 0
    %1401 = vmatpush2.bf16.msra.mxu0 0
    %1402 = vmatprep.subr.bf16.mxu0 0
    %1403 = vmatpush2.bf16.msra.mxu0 0
    %1404 = vmatprep.subr.bf16.mxu0 0
    %1405 = vmatpush2.bf16.msra.mxu0 0
    %1406 = vmatprep.subr.bf16.mxu0 0
    %1407 = vmatpush2.bf16.msra.mxu0 0
    %1408 = vmatprep.mubr.bf16.mxu0 0
    %1409 = vmatmul.mubr.bf16.gmra.mxu0 %v1374
    %v1410 = vpop.f32.mrf.mxu0
    %v1411 = vadd.f32 %v1359, %v1410
    %v1412 = vpop.f32.mrf.mxu0
    %v1413 = vpop.f32.mrf.mxu0
    %v1414 = vadd.f32 %v1359, %v1413
    %v1415 = vpop.f32.mrf.mxu0
    %1416 = vdwg.mxu0
    %v1417 = vmul.f32 %v1411, 0.5
    %v1418 = vmul.f32 %v1414, 0.5
    %v1419 = vmul.f32 %v1411, 0.044715
    %v1420 = vmul.f32 %v1414, 0.044715
    %v1421 = vmul.f32 %v1419, %v1411
    %v1422 = vmul.f32 %v1420, %v1414
    %v1423 = vmul.f32 %v1421, %v1411
    %v1424 = vmul.f32 %v1422, %v1414
    %v1425 = vadd.f32 %v1411, %v1423
    %v1426 = vadd.f32 %v1414, %v1424
    %v1427 = vmul.f32 %v1425, 0.7978846
    %v1428 = vmul.f32 %v1426, 0.7978846
    %v1429 = vtanh.pop %v1427
    %v1430 = vtanh.pop %v1428
    %v1431 = vadd.f32 %v1429, 1.0
    %v1432 = vadd.f32 %v1430, 1.0
    %v1433 = vmul.f32 %v1417, %v1431
    %v1434 = vmul.f32 %v1418, %v1432
    %v1435 = vpack.c.bf16 %v1434, %v1433
    %v1436 = vld [vmem:[%s8] sm:$0xf]
    %v1437 = vld [vmem:[%s8 + $0x4] sm:$0xf]
    %v1438 = vld [vmem:[%s8 + $0x8] sm:$0xf]
    %v1439 = vld [vmem:[%s8 + $0xc] sm:$0xf]
    %v1440 = vld [vmem:[%s8 + $0x10] sm:$0xf]
    %v1441 = vld [vmem:[%s8 + $0x14] sm:$0xf]
    %v1442 = vld [vmem:[%s8 + $0x18] sm:$0xf]
    %v1443 = vld [vmem:[%s8 + $0x1c] sm:$0xf]
    %v1444 = vld [vmem:[%s8 + $0x20] sm:$0xf]
    %v1445 = vld [vmem:[%s8 + $0x24] sm:$0xf]
    %v1446 = vld [vmem:[%s8 + $0x28] sm:$0xf]
    %v1447 = vld [vmem:[%s8 + $0x2c] sm:$0xf]
    %v1448 = vld [vmem:[%s8 + $0x30] sm:$0xf]
    %v1449 = vld [vmem:[%s8 + $0x34] sm:$0xf]
    %v1450 = vld [vmem:[%s8 + $0x38] sm:$0xf]
    %v1451 = vld [vmem:[%s8 + $0x3c] sm:$0xf]
    %v1452 = vlaneseq
    %v1453 = vshrl.u32 %v1452, 7
    %v1454 = vsub.s32 0, %v1453
    %v1455 = vrot.slane %v38, %v1454
    %v1472 = vunpack.c.l.b16 %v1436
    %v1473 = vunpack.c.l.b16 %v1437
    %v1474 = vunpack.c.l.b16 %v1438
    %v1475 = vunpack.c.l.b16 %v1439
    %v1476 = vunpack.c.l.b16 %v1440
    %v1477 = vunpack.c.l.b16 %v1441
    %v1478 = vunpack.c.l.b16 %v1442
    %v1479 = vunpack.c.l.b16 %v1443
    %v1480 = vunpack.c.l.b16 %v1444
    %v1481 = vunpack.c.l.b16 %v1445
    %v1482 = vunpack.c.l.b16 %v1446
    %v1483 = vunpack.c.l.b16 %v1447
    %v1484 = vunpack.c.l.b16 %v1448
    %v1485 = vunpack.c.l.b16 %v1449
    %v1486 = vunpack.c.l.b16 %v1450
    %v1487 = vunpack.c.l.b16 %v1451
    %v1488 = vpack.c.b16 %v1473, %v1472
    %v1489 = vpack.c.b16 %v1475, %v1474
    %v1490 = vpack.c.b16 %v1477, %v1476
    %v1491 = vpack.c.b16 %v1479, %v1478
    %v1492 = vpack.c.b16 %v1481, %v1480
    %v1493 = vpack.c.b16 %v1483, %v1482
    %v1494 = vpack.c.b16 %v1485, %v1484
    %v1495 = vpack.c.b16 %v1487, %v1486
    %1504 = vmatprep.subr.bf16.mxu0 0
    %1505 = vmatpush1.bf16.msra.mxu0 %v1495
    %1506 = vmatprep.subr.bf16.mxu0 0
    %1507 = vmatpush1.bf16.msra.mxu0 %v1494
    %1508 = vmatprep.subr.bf16.mxu0 0
    %1509 = vmatpush1.bf16.msra.mxu0 %v1493
    %1510 = vmatprep.subr.bf16.mxu0 0
    %1511 = vmatpush1.bf16.msra.mxu0 %v1492
    %1512 = vmatprep.subr.bf16.mxu0 0
    %1513 = vmatpush1.bf16.msra.mxu0 %v1491
    %1514 = vmatprep.subr.bf16.mxu0 0
    %1515 = vmatpush1.bf16.msra.mxu0 %v1490
    %1516 = vmatprep.subr.bf16.mxu0 0
    %1517 = vmatpush1.bf16.msra.mxu0 %v1489
    %1518 = vmatprep.subr.bf16.mxu0 0
    %1519 = vmatpush1.bf16.msra.mxu0 %v1488
    %1520 = vmatprep.subr.bf16.mxu0 0
    %1521 = vmatpush2.bf16.msra.mxu0 0
    %1522 = vmatprep.subr.bf16.mxu0 0
    %1523 = vmatpush2.bf16.msra.mxu0 0
    %1524 = vmatprep.subr.bf16.mxu0 0
    %1525 = vmatpush2.bf16.msra.mxu0 0
    %1526 = vmatprep.subr.bf16.mxu0 0
    %1527 = vmatpush2.bf16.msra.mxu0 0
    %1528 = vmatprep.subr.bf16.mxu0 0
    %1529 = vmatpush2.bf16.msra.mxu0 0
    %1530 = vmatprep.subr.bf16.mxu0 0
    %1531 = vmatpush2.bf16.msra.mxu0 0
    %1532 = vmatprep.subr.bf16.mxu0 0
    %1533 = vmatpush2.bf16.msra.mxu0 0
    %1534 = vmatprep.subr.bf16.mxu0 0
    %1535 = vmatpush2.bf16.msra.mxu0 0
    %1536 = vmatprep.mubr.bf16.mxu0 0
    %1537 = vmatmul.mubr.bf16.gmra.mxu0 %v1435
    %v1538 = vpop.f32.mrf.mxu0
    %v1539 = vadd.f32 %v1455, %v1538
    %v1540 = vpop.f32.mrf.mxu0
    %v1541 = vpop.f32.mrf.mxu0
    %v1542 = vadd.f32 %v1455, %v1541
    %v1543 = vpop.f32.mrf.mxu0
    %1544 = vdwg.mxu0
    %v1545 = vadd.f32 %v1309, %v1539
    %v1546 = vadd.f32 %v1310, %v1542
    %v1547 = vsel %vm193, %v1545, 0.0
    %1548 = vadd.xlane.f32.xlu0 %v1547
    %v1549 = vpop.xlane.xlu0 %1548
    %v1550 = vsel %vm193, %v1546, 0.0
    %1551 = vadd.xlane.f32.xlu0 %v1550
    %v1552 = vpop.xlane.xlu0 %1551
    %v1553 = vmul.f32 %v1549, %v200
    %v1554 = vmul.f32 %v1552, %v200
    %v1555 = vsub.f32 %v1545, %v1553
    %v1556 = vsub.f32 %v1546, %v1554
    %v1557 = vmul.f32 %v1555, %v1555
    %v1558 = vmul.f32 %v1556, %v1556
    %v1559 = vsel %vm193, %v1557, 0.0
    %1560 = vadd.xlane.f32.xlu0 %v1559
    %v1561 = vpop.xlane.xlu0 %1560
    %v1562 = vsel %vm193, %v1558, 0.0
    %1563 = vadd.xlane.f32.xlu0 %v1562
    %v1564 = vpop.xlane.xlu0 %1563
    %v1565 = vmul.f32 %v1561, %v200
    %v1566 = vmul.f32 %v1564, %v200
    %v1567 = vadd.f32 %v1565, 1e-05
    %v1568 = vadd.f32 %v1566, 1e-05
    %v1569 = vrsqrt.pop %v1567
    %v1570 = vrsqrt.pop %v1568
    %v1571 = vmul.f32 %v1555, %v1569
    %v1572 = vmul.f32 %v1556, %v1570
    %v1573 = vlaneseq
    %v1574 = vshrl.u32 %v1573, 7
    %v1575 = vsub.s32 1, %v1574
    %v1576 = vrot.slane %v38, %v1575
    %v1577 = vmul.f32 %v1571, %v1576
    %v1578 = vmul.f32 %v1572, %v1576
    %v1579 = vlaneseq
    %v1580 = vshrl.u32 %v1579, 7
    %v1581 = vsub.s32 2, %v1580
    %v1582 = vrot.slane %v38, %v1581
    %v1583 = vadd.f32 %v1577, %v1582
    %v1584 = vadd.f32 %v1578, %v1582
    %v1585 = vpack.c.bf16 %v1584, %v1583
    %v1586 = vld [vmem:[%s9] sm:$0xf]
    %v1587 = vld [vmem:[%s9 + $0x4] sm:$0xf]
    %v1588 = vld [vmem:[%s9 + $0x8] sm:$0xf]
    %v1589 = vld [vmem:[%s9 + $0xc] sm:$0xf]
    %v1594 = vunpack.c.l.b16 %v1586
    %v1595 = vunpack.c.l.b16 %v1587
    %v1596 = vunpack.c.l.b16 %v1588
    %v1597 = vunpack.c.l.b16 %v1589
    %v1598 = vpack.c.b16 %v1595, %v1594
    %v1599 = vpack.c.b16 %v1597, %v1596
    %v1603 = vsel %vm193, %v1585, 0
    %1605 = vmatprep.subr.bf16.mxu0 0
    %1606 = vmatpush1.bf16.msra.mxu0 0
    %1607 = vmatprep.subr.bf16.mxu0 0
    %1608 = vmatpush1.bf16.msra.mxu0 0
    %1609 = vmatprep.subr.bf16.mxu0 0
    %1610 = vmatpush1.bf16.msra.mxu0 0
    %1611 = vmatprep.subr.bf16.mxu0 0
    %1612 = vmatpush1.bf16.msra.mxu0 0
    %1613 = vmatprep.subr.bf16.mxu0 0
    %1614 = vmatpush1.bf16.msra.mxu0 0
    %1615 = vmatprep.subr.bf16.mxu0 0
    %1616 = vmatpush1.bf16.msra.mxu0 0
    %1617 = vmatprep.subr.bf16.mxu0 0
    %1618 = vmatpush1.bf16.msra.mxu0 %v1599
    %1619 = vmatprep.subr.bf16.mxu0 0
    %1620 = vmatpush1.bf16.msra.mxu0 %v1598
    %1621 = vmatprep.subr.bf16.mxu0 0
    %1622 = vmatpush2.bf16.msra.mxu0 0
    %1623 = vmatprep.subr.bf16.mxu0 0
    %1624 = vmatpush2.bf16.msra.mxu0 0
    %1625 = vmatprep.subr.bf16.mxu0 0
    %1626 = vmatpush2.bf16.msra.mxu0 0
    %1627 = vmatprep.subr.bf16.mxu0 0
    %1628 = vmatpush2.bf16.msra.mxu0 0
    %1629 = vmatprep.subr.bf16.mxu0 0
    %1630 = vmatpush2.bf16.msra.mxu0 0
    %1631 = vmatprep.subr.bf16.mxu0 0
    %1632 = vmatpush2.bf16.msra.mxu0 0
    %1633 = vmatprep.subr.bf16.mxu0 0
    %1634 = vmatpush2.bf16.msra.mxu0 0
    %1635 = vmatprep.subr.bf16.mxu0 0
    %1636 = vmatpush2.bf16.msra.mxu0 0
    %1637 = vmatprep.mubr.bf16.mxu0 0
    %1638 = vmatmul.mubr.bf16.gmra.mxu0 %v1603
    %v1639 = vpop.f32.mrf.mxu0
    %v1640 = vadd.f32 0.0, %v1639
    %v1641 = vpop.f32.mrf.mxu0
    %v1642 = vpop.f32.mrf.mxu0
    %v1643 = vadd.f32 0.0, %v1642
    %v1644 = vpop.f32.mrf.mxu0
    %1645 = vdwg.mxu0
    %1646 = vst [vmem:[#allocation2] sm:$0xff] %v1640
    %1647 = vst [vmem:[#allocation2 + $0x8] sm:$0xff] %v1643
    // Predicated region
    $region42: #{text_generation_logits.1} parent=1 // pred_check
      _
    $region43: #{text_generation_logits.1} parent=1 // pred_check_branch
      %1649 = sbr.rel (0) target = $region45
    $region44: #{text_generation_logits.1} parent=1 // pred_region
      %s1651 = ssub.s32 256, 256
      %1652 = vsyncadd [#allocation3], %s1651
      %s1653 = sshll.u32 [#allocation2], 4
      %s1654 = int_to_ptr.vmem [resolvable:$true] %s1653
      %1659 = dma.vmem_to_hbm [thread:$0]  %s1654, 256, %s10, [#allocation3], 128, 128, 8
    $region45: #{text_generation_logits.1} parent=1 // pred_fallthru
      _
    // Predicated region
    $region46: #{text_generation_logits.1} parent=1 // pred_check
      _
    $region47: #{text_generation_logits.1} parent=1 // pred_check_branch
      %1661 = sbr.rel (0) target = $region49
    $region48: #{text_generation_logits.1} parent=1 // pred_region
      %1662 = dma.done [#allocation3], 256
    $region49: #{text_generation_logits.1} parent=1 // pred_fallthru
      _
    %1663 = vsyncpa [#allocation3], 1

</llo_original>
